<compile_context>
chip_gen: v7x
topology: tpu7x:2x2x1
jax: 0.10.0
libtpu: 0.0.40
codegen_flags: <defaults>
</compile_context>

<pallas_src>
import jax
import jax.numpy as jnp
from jax.experimental import pallas as pl
from jax.experimental.pallas import tpu as pltpu

_LANE = 128     # lane width: feature/latent dims padded to multiples of this
_SUBPACK = 16   # row pack for bf16 tiles (covers the f32 sublane minimum of 8)
_TB_MAX = 512   # max batch-tile rows (big tiles amortize per-grid-step cost)


def _round_up(x, m):
    return ((x + m - 1) // m) * m


def _pick_batch_tile(batch):
    """Smallest tile (multiple of 16) s.t. <=512-row tiles cover the batch."""
    n_tiles = pl.cdiv(batch, _TB_MAX)
    return _round_up(pl.cdiv(batch, n_tiles), _SUBPACK)


def _autoencoder_kernel(x_ref, w_enc_ref, b_enc_ref, w_dec_ref, b_dec_ref,
                        z_ref, y_ref):
    """Fused encode->decode for one batch tile (weights VMEM-resident).

    x_ref     : [TB, D]  float32   (cast to bf16 in-kernel on the VPU)
    w_enc_ref : [D, H]   bfloat16
    b_enc_ref : [1, H]   float32
    w_dec_ref : [H, D]   bfloat16
    b_dec_ref : [1, D]   float32
    z_ref     : [TB, H]  bfloat16  (latent, "encode" output)
    y_ref     : [TB, D]  bfloat16  (reconstruction, "forward" output)
    """
    x = x_ref[...].astype(jnp.bfloat16)   # in-kernel cast: no extra HBM pass

    # encode: bf16 MXU matmul with f32 accumulation; bias + ReLU epilogue f32
    z = jnp.dot(x, w_enc_ref[...], preferred_element_type=jnp.float32)
    z = jnp.maximum(z + b_enc_ref[...], 0.0)
    z_bf16 = z.astype(jnp.bfloat16)
    z_ref[...] = z_bf16

    # decode: bf16 MXU matmul with f32 accumulation; f32 bias epilogue
    y = jnp.dot(z_bf16, w_dec_ref[...], preferred_element_type=jnp.float32)
    y_ref[...] = (y + b_dec_ref[...]).astype(jnp.bfloat16)


def _build_forward(tb, bp, dp, hp, weight_mode):
    """Builds the pallas_call for padded shapes (bp, dp, hp), batch tile tb."""
    n_tiles = bp // tb

    def const_spec(shape):
        # Weights/biases: same block every grid step -> VMEM-resident.
        # Single-buffer them when the jax build supports pipeline_mode.
        if weight_mode is None:
            return pl.BlockSpec(shape, lambda i: (0, 0))
        return pl.BlockSpec(shape, lambda i: (0, 0), pipeline_mode=weight_mode)

    cost = pl.CostEstimate(
        flops=4 * bp * dp * hp,                       # encode + decode matmuls
        transcendentals=0,
        bytes_accessed=(bp * dp * 4                   # x (f32 in)
                        + 2 * dp * hp * 2             # both bf16 weights
                        + (hp + dp) * 4               # f32 biases
                        + bp * hp * 2 + bp * dp * 2), # bf16 z and y out
    )

    # TODO(synk): for large D*Hid on v7x (64 MiB VMEM) add a K-reduction grid
    # axis ("arbitrary", last) with an f32 VMEM accumulator, or split
    # encode/decode into two pallas_calls so only one weight matrix is
    # VMEM-resident at a time; unnecessary at these shapes.  (If the model
    # config is tunable, Hid as a multiple of 256 doubles MXU fill on v6e/v7x
    # once the kernel becomes compute-bound.)
    return pl.pallas_call(
        _autoencoder_kernel,
        out_shape=(
            jax.ShapeDtypeStruct((bp, hp), jnp.bfloat16),   # latent
            jax.ShapeDtypeStruct((bp, dp), jnp.bfloat16),   # reconstruction
        ),
        grid=(n_tiles,),
        in_specs=[
            pl.BlockSpec((tb, dp), lambda i: (i, 0)),       # x: walk batch tiles
            const_spec((dp, hp)),
            const_spec((1, hp)),
            const_spec((hp, dp)),
            const_spec((1, dp)),
        ],
        out_specs=(
            pl.BlockSpec((tb, hp), lambda i: (i, 0)),
            pl.BlockSpec((tb, dp), lambda i: (i, 0)),
        ),
        compiler_params=pltpu.CompilerParams(
            dimension_semantics=("parallel",),
            vmem_limit_bytes=48 << 20,
        ),
        cost_estimate=cost,
    )


def _run_pallas(x_p, w_enc_p, b_enc_p, w_dec_p, b_dec_p, tb):
    bp, dp = x_p.shape
    hp = w_enc_p.shape[1]
    args = (x_p, w_enc_p, b_enc_p, w_dec_p, b_dec_p)
    try:
        return _build_forward(tb, bp, dp, hp, pl.Buffered(1))(*args)
    except Exception:
        # TODO(synk): this jax build does not accept pipeline_mode on the
        # pallas_call grid pipeline; fall back to default double-buffered
        # weights (2x weight VMEM, correctness unchanged).
        return _build_forward(tb, bp, dp, hp, None)(*args)


def prepare_params(w_enc, b_enc, w_dec, b_dec):
    """One-time (outside the hot path) pad + bf16 cast of the parameters.

    NOTE: the zero padding of b_enc is load-bearing: relu(0 + 0) = 0 keeps the
    padded latent columns inert in the decode matmul.
    """
    D, Hid = w_enc.shape
    Dp = _round_up(D, _LANE)
    Hp = _round_up(Hid, _LANE)

    def pad2(a, rows, cols, dtype):
        a = a.astype(dtype)
        pr, pc = rows - a.shape[0], cols - a.shape[1]
        if pr or pc:
            a = jnp.pad(a, ((0, pr), (0, pc)))
        return a

    return dict(
        w_enc=pad2(w_enc, Dp, Hp, jnp.bfloat16),
        b_enc=pad2(b_enc.reshape(1, -1), 1, Hp, jnp.float32),
        w_dec=pad2(w_dec, Hp, Dp, jnp.bfloat16),
        b_dec=pad2(b_dec.reshape(1, -1), 1, Dp, jnp.float32),
        D=D, Hid=Hid, Dp=Dp, Hp=Hp,
    )


def autoencoder_forward(x_nchw, params):
    """NCHW -> flatten/pad -> batch-tiled Pallas kernel -> unpad/unflatten.

    Returns (recon_nchw, latent), both bfloat16, mirroring forward(x) and
    encode(x).  (If only the reconstruction is needed, the latent output could
    be dropped from out_shape to save ~8% HBM traffic at these shapes.)
    """
    B = x_nchw.shape[0]
    feat_shape = x_nchw.shape[1:]
    D, Hid, Dp, Hp = params["D"], params["Hid"], params["Dp"], params["Hp"]

    x_flat = x_nchw.reshape(B, -1)
    assert x_flat.shape[1] == D

    tb = _pick_batch_tile(B)
    Bp = _round_up(B, tb)
    pad_b, pad_d = Bp - B, Dp - D
    if pad_b or pad_d:
        x_flat = jnp.pad(x_flat, ((0, pad_b), (0, pad_d)))

    z_p, y_p = _run_pallas(x_flat, params["w_enc"], params["b_enc"],
                           params["w_dec"], params["b_dec"], tb)

    recon = y_p[:B, :D].reshape((B,) + feat_shape)
    latent = z_p[:B, :Hid]
    return recon, latent


def _reference_forward(x_nchw, w_enc, b_enc, w_dec, b_dec):
    """Plain-JAX reference with the same numerics (bf16 matmul, f32 accum)."""
    B = x_nchw.shape[0]
    x = x_nchw.reshape(B, -1).astype(jnp.bfloat16)
    z = jnp.dot(x, w_enc.astype(jnp.bfloat16),
                preferred_element_type=jnp.float32)
    z = jnp.maximum(z + b_enc.astype(jnp.float32), 0.0).astype(jnp.bfloat16)
    y = jnp.dot(z, w_dec.astype(jnp.bfloat16),
                preferred_element_type=jnp.float32)
    y = (y + b_dec.astype(jnp.float32)).astype(jnp.bfloat16)
    return y.reshape(x_nchw.shape), z


if __name__ == "__main__":
    key = jax.random.PRNGKey(0)
    B, C, Himg, Wimg = 2, 4, 16, 16            # small NCHW input
    D = C * Himg * Wimg                         # 1024 flattened features
    HID = 128                                   # latent dim (lane-aligned)

    k_x, k_we, k_be, k_wd, k_bd = jax.random.split(key, 5)
    x = jax.random.normal(k_x, (B, C, Himg, Wimg), dtype=jnp.float32)
    w_enc = jax.random.normal(k_we, (D, HID), dtype=jnp.float32) * 0.02
    b_enc = jax.random.normal(k_be, (1, HID), dtype=jnp.float32) * 0.01
    w_dec = jax.random.normal(k_wd, (HID, D), dtype=jnp.float32) * 0.02
    b_dec = jax.random.normal(k_bd, (1, D), dtype=jnp.float32) * 0.01

    params = prepare_params(w_enc, b_enc, w_dec, b_dec)   # once, off hot path
    recon, latent = autoencoder_forward(x, params)
    recon = jax.block_until_ready(recon)
    latent = jax.block_until_ready(latent)

    # sanity check against plain-JAX reference (same bf16/f32 precision)
    ref_recon, ref_latent = _reference_forward(x, w_enc, b_enc, w_dec, b_dec)
    assert recon.shape == (B, C, Himg, Wimg)
    assert latent.shape == (B, HID)
    assert jnp.allclose(recon.astype(jnp.float32),
                        ref_recon.astype(jnp.float32), atol=1e-2, rtol=1e-2)
    assert jnp.allclose(latent.astype(jnp.float32),
                        ref_latent.astype(jnp.float32), atol=1e-2, rtol=1e-2)

    print("KERNEL_OK")
</pallas_src>

<mosaic_0001>
module attributes {stable_mosaic.version = 11 : i64} {
  func.func @_autoencoder_kernel(%arg0: i32, %arg1: memref<16x1024xf32, #tpu.memory_space<vmem>>, %arg2: memref<1024x128xbf16, #tpu.memory_space<vmem>>, %arg3: memref<1x128xf32, #tpu.memory_space<vmem>>, %arg4: memref<128x1024xbf16, #tpu.memory_space<vmem>>, %arg5: memref<1x1024xf32, #tpu.memory_space<vmem>>, %arg6: memref<16x128xbf16, #tpu.memory_space<vmem>>, %arg7: memref<16x1024xbf16, #tpu.memory_space<vmem>>) attributes {dimension_semantics = [#tpu.dimension_semantics<parallel>], iteration_bounds = array<i64: 1>, scalar_prefetch = 0 : i64, scratch_operands = 0 : i64, tpu.core_type = #tpu.core_type<tc>, window_params = [{transform_indices = @transform_0, window_bounds = array<i64: 16, 1024>}, {pipeline_mode = #tpu.pipeline_mode<synchronous>, transform_indices = @transform_1, window_bounds = array<i64: 1024, 128>}, {pipeline_mode = #tpu.pipeline_mode<synchronous>, transform_indices = @transform_2, window_bounds = array<i64: 1, 128>}, {pipeline_mode = #tpu.pipeline_mode<synchronous>, transform_indices = @transform_3, window_bounds = array<i64: 128, 1024>}, {pipeline_mode = #tpu.pipeline_mode<synchronous>, transform_indices = @transform_4, window_bounds = array<i64: 1, 1024>}, {transform_indices = @transform_5, window_bounds = array<i64: 16, 128>}, {transform_indices = @transform_6, window_bounds = array<i64: 16, 1024>}]} {
    %c0 = arith.constant 0 : index
    %c0_0 = arith.constant 0 : index
    %0 = vector.load %arg1[%c0, %c0_0] : memref<16x1024xf32, #tpu.memory_space<vmem>>, vector<16x1024xf32>
    %1 = arith.truncf %0 : vector<16x1024xf32> to vector<16x1024xbf16>
    %c0_1 = arith.constant 0 : index
    %c0_2 = arith.constant 0 : index
    %2 = vector.load %arg2[%c0_1, %c0_2] : memref<1024x128xbf16, #tpu.memory_space<vmem>>, vector<1024x128xbf16>
    %cst = arith.constant dense<0.000000e+00> : vector<16x128xf32>
    %3 = tpu.matmul %1, %2, %cst {dimension_numbers = #tpu.dot_dimension_numbers<[1], [0], [0], [1], [0, 0, 1, 1], [], []>} : vector<16x1024xbf16>, vector<1024x128xbf16>, vector<16x128xf32> -> vector<16x128xf32>
    %c0_3 = arith.constant 0 : index
    %c0_4 = arith.constant 0 : index
    %4 = vector.load %arg3[%c0_3, %c0_4] : memref<1x128xf32, #tpu.memory_space<vmem>>, vector<1x128xf32>
    %5 = vector.broadcast %4 : vector<1x128xf32> to vector<16x128xf32>
    %6 = arith.addf %3, %5 : vector<16x128xf32>
    %cst_5 = arith.constant 0.000000e+00 : f32
    %7 = vector.broadcast %cst_5 : f32 to vector<16x128xf32>
    %8 = arith.maximumf %6, %7 : vector<16x128xf32>
    %9 = arith.truncf %8 : vector<16x128xf32> to vector<16x128xbf16>
    %c0_6 = arith.constant 0 : index
    %c0_7 = arith.constant 0 : index
    %10 = vector.load %arg6[%c0_6, %c0_7] : memref<16x128xbf16, #tpu.memory_space<vmem>>, vector<16x128xbf16>
    tpu.vector_store %arg6[%c0_6, %c0_7], %9 {strides = array<i32>} : memref<16x128xbf16, #tpu.memory_space<vmem>>, vector<16x128xbf16>,
    %c0_8 = arith.constant 0 : index
    %c0_9 = arith.constant 0 : index
    %11 = vector.load %arg4[%c0_8, %c0_9] : memref<128x1024xbf16, #tpu.memory_space<vmem>>, vector<128x1024xbf16>
    %cst_10 = arith.constant dense<0.000000e+00> : vector<16x1024xf32>
    %12 = tpu.matmul %9, %11, %cst_10 {dimension_numbers = #tpu.dot_dimension_numbers<[1], [0], [0], [1], [0, 0, 1, 1], [], []>} : vector<16x128xbf16>, vector<128x1024xbf16>, vector<16x1024xf32> -> vector<16x1024xf32>
    %c0_11 = arith.constant 0 : index
    %c0_12 = arith.constant 0 : index
    %13 = vector.load %arg5[%c0_11, %c0_12] : memref<1x1024xf32, #tpu.memory_space<vmem>>, vector<1x1024xf32>
    %14 = vector.broadcast %13 : vector<1x1024xf32> to vector<16x1024xf32>
    %15 = arith.addf %12, %14 : vector<16x1024xf32>
    %16 = arith.truncf %15 : vector<16x1024xf32> to vector<16x1024xbf16>
    %c0_13 = arith.constant 0 : index
    %c0_14 = arith.constant 0 : index
    %17 = vector.load %arg7[%c0_13, %c0_14] : memref<16x1024xbf16, #tpu.memory_space<vmem>>, vector<16x1024xbf16>
    tpu.vector_store %arg7[%c0_13, %c0_14], %16 {strides = array<i32>} : memref<16x1024xbf16, #tpu.memory_space<vmem>>, vector<16x1024xbf16>,
    return
  }
  func.func @transform_0(%arg0: i32) -> (i32, i32) {
    %c0_i32 = arith.constant 0 : i32
    %c0_i32_0 = arith.constant 0 : i32
    return %arg0, %c0_i32 : i32, i32
  }
  func.func @transform_1(%arg0: i32) -> (i32, i32) {
    %c0_i32 = arith.constant 0 : i32
    %c0_i32_0 = arith.constant 0 : i32
    %c0_i32_1 = arith.constant 0 : i32
    return %c0_i32, %c0_i32_0 : i32, i32
  }
  func.func @transform_2(%arg0: i32) -> (i32, i32) {
    %c0_i32 = arith.constant 0 : i32
    %c0_i32_0 = arith.constant 0 : i32
    %c0_i32_1 = arith.constant 0 : i32
    return %c0_i32, %c0_i32_0 : i32, i32
  }
  func.func @transform_3(%arg0: i32) -> (i32, i32) {
    %c0_i32 = arith.constant 0 : i32
    %c0_i32_0 = arith.constant 0 : i32
    %c0_i32_1 = arith.constant 0 : i32
    return %c0_i32, %c0_i32_0 : i32, i32
  }
  func.func @transform_4(%arg0: i32) -> (i32, i32) {
    %c0_i32 = arith.constant 0 : i32
    %c0_i32_0 = arith.constant 0 : i32
    %c0_i32_1 = arith.constant 0 : i32
    return %c0_i32, %c0_i32_0 : i32, i32
  }
  func.func @transform_5(%arg0: i32) -> (i32, i32) {
    %c0_i32 = arith.constant 0 : i32
    %c0_i32_0 = arith.constant 0 : i32
    return %arg0, %c0_i32 : i32, i32
  }
  func.func @transform_6(%arg0: i32) -> (i32, i32) {
    %c0_i32 = arith.constant 0 : i32
    %c0_i32_0 = arith.constant 0 : i32
    return %arg0, %c0_i32 : i32, i32
  }
}

module attributes {stable_mosaic.version = 11 : i64} {
  func.func @_autoencoder_kernel(%arg0: i32, %arg1: memref<16x1024xf32, #tpu.memory_space<vmem>>, %arg2: memref<1024x128xbf16, #tpu.memory_space<vmem>>, %arg3: memref<1x128xf32, #tpu.memory_space<vmem>>, %arg4: memref<128x1024xbf16, #tpu.memory_space<vmem>>, %arg5: memref<1x1024xf32, #tpu.memory_space<vmem>>, %arg6: memref<16x128xbf16, #tpu.memory_space<vmem>>, %arg7: memref<16x1024xbf16, #tpu.memory_space<vmem>>) attributes {dimension_semantics = [#tpu.dimension_semantics<parallel>], iteration_bounds = array<i64: 1>, scalar_prefetch = 0 : i64, scratch_operands = 0 : i64, tpu.core_type = #tpu.core_type<tc>, window_params = [{transform_indices = @transform_0, window_bounds = array<i64: 16, 1024>}, {pipeline_mode = #tpu.pipeline_mode<synchronous>, transform_indices = @transform_1, window_bounds = array<i64: 1024, 128>}, {pipeline_mode = #tpu.pipeline_mode<synchronous>, transform_indices = @transform_2, window_bounds = array<i64: 1, 128>}, {pipeline_mode = #tpu.pipeline_mode<synchronous>, transform_indices = @transform_3, window_bounds = array<i64: 128, 1024>}, {pipeline_mode = #tpu.pipeline_mode<synchronous>, transform_indices = @transform_4, window_bounds = array<i64: 1, 1024>}, {transform_indices = @transform_5, window_bounds = array<i64: 16, 128>}, {transform_indices = @transform_6, window_bounds = array<i64: 16, 1024>}]} {
    %c0 = arith.constant 0 : index
    %c0_0 = arith.constant 0 : index
    %0 = vector.load %arg1[%c0, %c0_0] : memref<16x1024xf32, #tpu.memory_space<vmem>>, vector<16x1024xf32>
    %1 = arith.truncf %0 : vector<16x1024xf32> to vector<16x1024xbf16>
    %c0_1 = arith.constant 0 : index
    %c0_2 = arith.constant 0 : index
    %2 = vector.load %arg2[%c0_1, %c0_2] : memref<1024x128xbf16, #tpu.memory_space<vmem>>, vector<1024x128xbf16>
    %cst = arith.constant dense<0.000000e+00> : vector<16x128xf32>
    %3 = tpu.matmul %1, %2, %cst {dimension_numbers = #tpu.dot_dimension_numbers<[1], [0], [0], [1], [0, 0, 1, 1], [], []>} : vector<16x1024xbf16>, vector<1024x128xbf16>, vector<16x128xf32> -> vector<16x128xf32>
    %c0_3 = arith.constant 0 : index
    %c0_4 = arith.constant 0 : index
    %4 = vector.load %arg3[%c0_3, %c0_4] : memref<1x128xf32, #tpu.memory_space<vmem>>, vector<1x128xf32>
    %5 = vector.broadcast %4 : vector<1x128xf32> to vector<16x128xf32>
    %6 = arith.addf %3, %5 : vector<16x128xf32>
    %cst_5 = arith.constant 0.000000e+00 : f32
    %7 = vector.broadcast %cst_5 : f32 to vector<16x128xf32>
    %8 = arith.maximumf %6, %7 : vector<16x128xf32>
    %9 = arith.truncf %8 : vector<16x128xf32> to vector<16x128xbf16>
    %c0_6 = arith.constant 0 : index
    %c0_7 = arith.constant 0 : index
    %10 = vector.load %arg6[%c0_6, %c0_7] : memref<16x128xbf16, #tpu.memory_space<vmem>>, vector<16x128xbf16>
    tpu.vector_store %arg6[%c0_6, %c0_7], %9 {strides = array<i32>} : memref<16x128xbf16, #tpu.memory_space<vmem>>, vector<16x128xbf16>,
    %c0_8 = arith.constant 0 : index
    %c0_9 = arith.constant 0 : index
    %11 = vector.load %arg4[%c0_8, %c0_9] : memref<128x1024xbf16, #tpu.memory_space<vmem>>, vector<128x1024xbf16>
    %cst_10 = arith.constant dense<0.000000e+00> : vector<16x1024xf32>
    %12 = tpu.matmul %9, %11, %cst_10 {dimension_numbers = #tpu.dot_dimension_numbers<[1], [0], [0], [1], [0, 0, 1, 1], [], []>} : vector<16x128xbf16>, vector<128x1024xbf16>, vector<16x1024xf32> -> vector<16x1024xf32>
    %c0_11 = arith.constant 0 : index
    %c0_12 = arith.constant 0 : index
    %13 = vector.load %arg5[%c0_11, %c0_12] : memref<1x1024xf32, #tpu.memory_space<vmem>>, vector<1x1024xf32>
    %14 = vector.broadcast %13 : vector<1x1024xf32> to vector<16x1024xf32>
    %15 = arith.addf %12, %14 : vector<16x1024xf32>
    %16 = arith.truncf %15 : vector<16x1024xf32> to vector<16x1024xbf16>
    %c0_13 = arith.constant 0 : index
    %c0_14 = arith.constant 0 : index
    %17 = vector.load %arg7[%c0_13, %c0_14] : memref<16x1024xbf16, #tpu.memory_space<vmem>>, vector<16x1024xbf16>
    tpu.vector_store %arg7[%c0_13, %c0_14], %16 {strides = array<i32>} : memref<16x1024xbf16, #tpu.memory_space<vmem>>, vector<16x1024xbf16>,
    return
  }
  func.func @transform_0(%arg0: i32) -> (i32, i32) {
    %c0_i32 = arith.constant 0 : i32
    %c0_i32_0 = arith.constant 0 : i32
    return %arg0, %c0_i32 : i32, i32
  }
  func.func @transform_1(%arg0: i32) -> (i32, i32) {
    %c0_i32 = arith.constant 0 : i32
    %c0_i32_0 = arith.constant 0 : i32
    %c0_i32_1 = arith.constant 0 : i32
    return %c0_i32, %c0_i32_0 : i32, i32
  }
  func.func @transform_2(%arg0: i32) -> (i32, i32) {
    %c0_i32 = arith.constant 0 : i32
    %c0_i32_0 = arith.constant 0 : i32
    %c0_i32_1 = arith.constant 0 : i32
    return %c0_i32, %c0_i32_0 : i32, i32
  }
  func.func @transform_3(%arg0: i32) -> (i32, i32) {
    %c0_i32 = arith.constant 0 : i32
    %c0_i32_0 = arith.constant 0 : i32
    %c0_i32_1 = arith.constant 0 : i32
    return %c0_i32, %c0_i32_0 : i32, i32
  }
  func.func @transform_4(%arg0: i32) -> (i32, i32) {
    %c0_i32 = arith.constant 0 : i32
    %c0_i32_0 = arith.constant 0 : i32
    %c0_i32_1 = arith.constant 0 : i32
    return %c0_i32, %c0_i32_0 : i32, i32
  }
  func.func @transform_5(%arg0: i32) -> (i32, i32) {
    %c0_i32 = arith.constant 0 : i32
    %c0_i32_0 = arith.constant 0 : i32
    return %arg0, %c0_i32 : i32, i32
  }
  func.func @transform_6(%arg0: i32) -> (i32, i32) {
    %c0_i32 = arith.constant 0 : i32
    %c0_i32_0 = arith.constant 0 : i32
    return %arg0, %c0_i32 : i32, i32
  }
}

</mosaic_0001>

<llo_original>
// kernel: tpu_custom_call.1
$region0: #{tpu_custom_call.1}
  #allocation0 [shape = 'u32[]', space=smem, size = 0x4, offset = 0x4, fixed_abs, tag = 'smem constant byte address 0x4 - core index']
  #allocation1 [shape = 'u32[144,128]{1,0:T(1,128)}', space=vmem, size = 0x12000, scoped, tag = 'internal scratch']
  %s0 = inlined_call_operand.hbm [shape: f32[16,1024], index: 0, kind: input, shape index: {}]
  %s1 = inlined_call_operand.hbm [shape: bf16[1024,128], index: 1, kind: input, shape index: {}]
  %s2 = inlined_call_operand.vmem [shape: f32[1,128], index: 2, kind: input, shape index: {}]
  %s3 = inlined_call_operand.hbm [shape: bf16[128,1024], index: 3, kind: input, shape index: {}]
  %s4 = inlined_call_operand.vmem [shape: f32[1,1024], index: 4, kind: input, shape index: {}]
  %s5 = inlined_call_operand.hbm [shape: bf16[16,128], index: 5, kind: output, shape index: {0}]
  %s6 = inlined_call_operand.hbm [shape: bf16[16,1024], index: 6, kind: output, shape index: {1}]
  %7 = xla_tuple %s5, %s6
  %s8 = sld [smem:[#allocation0]]
  $region50: #{tpu_custom_call.1} parent=0
    _
  %s10 = ssub.s32 1, %s8
  %s11 = scalar_select 0, %s10, %s8
  $region1: #{tpu_custom_call.1} parent=0
    #allocation2 [shape = 'u8[65536]{0}', space=vmem, size = 0x10000, scoped, tag = 'input window, operand 0, single buffered']
    #allocation3 [shape = 's32[1]{0}', space=sflag, size = 0x4, scoped, tag = 'scoped memory for tpu_custom_call.1']
    #allocation4 [shape = 's32[1]{0}', space=sflag, size = 0x4, scoped, tag = 'scoped memory for tpu_custom_call.1']
    #allocation5 [shape = 'u8[262144]{0}', space=vmem, size = 0x40000, scoped, tag = 'input window, operand 1, single buffered']
    #allocation6 [shape = 's32[1]{0}', space=sflag, size = 0x4, scoped, tag = 'scoped memory for tpu_custom_call.1']
    #allocation7 [shape = 'u8[262144]{0}', space=vmem, size = 0x40000, scoped, tag = 'input window, operand 3, single buffered']
    #allocation8 [shape = 'u8[4096]{0}', space=vmem, size = 0x1000, scoped, tag = 'output window, operand 0, single buffered']
    #allocation9 [shape = 'u8[32768]{0}', space=vmem, size = 0x8000, scoped, tag = 'output window, operand 1, single buffered']
    #allocation10 [shape = 's32[1]{0}', space=sflag, size = 0x4, scoped, tag = 'scoped memory for tpu_custom_call.1']
    %12 = vsyncpa [#allocation3], 0
    %13 = vsyncpa [#allocation6], 0
    %14 = vsyncpa [#allocation4], 0
    %15 = vsyncpa [#allocation10], 0
    // Predicated region
    $region2: #{tpu_custom_call.1} parent=1 // pred_check
      _
    $region3: #{tpu_custom_call.1} parent=1 // pred_check_branch
      %17 = sbr.rel (0) target = $region5
    $region4: #{tpu_custom_call.1} parent=1 // pred_region
      %s19 = ssub.s32 2048, 2048
      %20 = vsyncadd [#allocation3], %s19
      %s21 = sshll.u32 [#allocation2], 4
      %s22 = int_to_ptr.vmem [resolvable:$true] %s21
      %27 = dma.hbm_to_vmem [thread:$0]  %s0, 2048, %s22, [#allocation3], 1024, 1024, 64
    $region5: #{tpu_custom_call.1} parent=1 // pred_fallthru
      _
    // Predicated region
    $region6: #{tpu_custom_call.1} parent=1 // pred_check
      _
    $region7: #{tpu_custom_call.1} parent=1 // pred_check_branch
      %29 = sbr.rel (0) target = $region9
    $region8: #{tpu_custom_call.1} parent=1 // pred_region
      %s31 = ssub.s32 8192, 8192
      %32 = vsyncadd [#allocation6], %s31
      %s33 = sshll.u32 [#allocation5], 4
      %s34 = int_to_ptr.vmem [resolvable:$true] %s33
      %39 = dma.hbm_to_vmem [thread:$0]  %s1, 8192, %s34, [#allocation6], 64, 64, 4
    $region9: #{tpu_custom_call.1} parent=1 // pred_fallthru
      _
    // Predicated region
    $region10: #{tpu_custom_call.1} parent=1 // pred_check
      _
    $region11: #{tpu_custom_call.1} parent=1 // pred_check_branch
      %41 = sbr.rel (0) target = $region13
    $region12: #{tpu_custom_call.1} parent=1 // pred_region
      _
    $region13: #{tpu_custom_call.1} parent=1 // pred_fallthru
      _
    // Predicated region
    $region14: #{tpu_custom_call.1} parent=1 // pred_check
      _
    $region15: #{tpu_custom_call.1} parent=1 // pred_check_branch
      %43 = sbr.rel (0) target = $region17
    $region16: #{tpu_custom_call.1} parent=1 // pred_region
      %s45 = ssub.s32 8192, 8192
      %46 = vsyncadd [#allocation6], %s45
      %s47 = sshll.u32 [#allocation7], 4
      %s48 = int_to_ptr.vmem [resolvable:$true] %s47
      %53 = dma.hbm_to_vmem [thread:$0]  %s3, 8192, %s48, [#allocation6], 512, 512, 32
    $region17: #{tpu_custom_call.1} parent=1 // pred_fallthru
      _
    // Predicated region
    $region18: #{tpu_custom_call.1} parent=1 // pred_check
      _
    $region19: #{tpu_custom_call.1} parent=1 // pred_check_branch
      %55 = sbr.rel (0) target = $region21
    $region20: #{tpu_custom_call.1} parent=1 // pred_region
      _
    $region21: #{tpu_custom_call.1} parent=1 // pred_fallthru
      _
    // Predicated region
    $region22: #{tpu_custom_call.1} parent=1 // pred_check
      _
    $region23: #{tpu_custom_call.1} parent=1 // pred_check_branch
      %57 = sbr.rel (0) target = $region25
    $region24: #{tpu_custom_call.1} parent=1 // pred_region
      %58 = dma.done [#allocation3], 2048
    $region25: #{tpu_custom_call.1} parent=1 // pred_fallthru
      _
    // Predicated region
    $region26: #{tpu_custom_call.1} parent=1 // pred_check
      _
    $region27: #{tpu_custom_call.1} parent=1 // pred_check_branch
      %60 = sbr.rel (0) target = $region29
    $region28: #{tpu_custom_call.1} parent=1 // pred_region
      %61 = dma.done [#allocation6], 8192
    $region29: #{tpu_custom_call.1} parent=1 // pred_fallthru
      _
    // Predicated region
    $region30: #{tpu_custom_call.1} parent=1 // pred_check
      _
    $region31: #{tpu_custom_call.1} parent=1 // pred_check_branch
      %63 = sbr.rel (0) target = $region33
    $region32: #{tpu_custom_call.1} parent=1 // pred_region
      %64 = dma.done [#allocation6], 8192
    $region33: #{tpu_custom_call.1} parent=1 // pred_fallthru
      _
    %v66 = vld [vmem:[#allocation2] sm:$0xff]
    %v67 = vld [vmem:[#allocation2 + $0x8] sm:$0xff]
    %v68 = vld [vmem:[#allocation2 + $0x10] sm:$0xff]
    %v69 = vld [vmem:[#allocation2 + $0x18] sm:$0xff]
    %v70 = vld [vmem:[#allocation2 + $0x20] sm:$0xff]
    %v71 = vld [vmem:[#allocation2 + $0x28] sm:$0xff]
    %v72 = vld [vmem:[#allocation2 + $0x30] sm:$0xff]
    %v73 = vld [vmem:[#allocation2 + $0x38] sm:$0xff]
    %v74 = vld [vmem:[#allocation2 + $0x40] sm:$0xff]
    %v75 = vld [vmem:[#allocation2 + $0x48] sm:$0xff]
    %v76 = vld [vmem:[#allocation2 + $0x50] sm:$0xff]
    %v77 = vld [vmem:[#allocation2 + $0x58] sm:$0xff]
    %v78 = vld [vmem:[#allocation2 + $0x60] sm:$0xff]
    %v79 = vld [vmem:[#allocation2 + $0x68] sm:$0xff]
    %v80 = vld [vmem:[#allocation2 + $0x70] sm:$0xff]
    %v81 = vld [vmem:[#allocation2 + $0x78] sm:$0xff]
    %v82 = vpack.c.bf16 %v74, %v66
    %v83 = vpack.c.bf16 %v75, %v67
    %v84 = vpack.c.bf16 %v76, %v68
    %v85 = vpack.c.bf16 %v77, %v69
    %v86 = vpack.c.bf16 %v78, %v70
    %v87 = vpack.c.bf16 %v79, %v71
    %v88 = vpack.c.bf16 %v80, %v72
    %v89 = vpack.c.bf16 %v81, %v73
    %v90 = vld [vmem:[#allocation5] sm:$0xf]
    %v91 = vld [vmem:[#allocation5 + $0x4] sm:$0xf]
    %v92 = vld [vmem:[#allocation5 + $0x8] sm:$0xf]
    %v93 = vld [vmem:[#allocation5 + $0xc] sm:$0xf]
    %v94 = vld [vmem:[#allocation5 + $0x10] sm:$0xf]
    %v95 = vld [vmem:[#allocation5 + $0x14] sm:$0xf]
    %v96 = vld [vmem:[#allocation5 + $0x18] sm:$0xf]
    %v97 = vld [vmem:[#allocation5 + $0x1c] sm:$0xf]
    %v98 = vld [vmem:[#allocation5 + $0x20] sm:$0xf]
    %v99 = vld [vmem:[#allocation5 + $0x24] sm:$0xf]
    %v100 = vld [vmem:[#allocation5 + $0x28] sm:$0xf]
    %v101 = vld [vmem:[#allocation5 + $0x2c] sm:$0xf]
    %v102 = vld [vmem:[#allocation5 + $0x30] sm:$0xf]
    %v103 = vld [vmem:[#allocation5 + $0x34] sm:$0xf]
    %v104 = vld [vmem:[#allocation5 + $0x38] sm:$0xf]
    %v105 = vld [vmem:[#allocation5 + $0x3c] sm:$0xf]
    %v106 = vld [vmem:[#allocation5 + $0x40] sm:$0xf]
    %v107 = vld [vmem:[#allocation5 + $0x44] sm:$0xf]
    %v108 = vld [vmem:[#allocation5 + $0x48] sm:$0xf]
    %v109 = vld [vmem:[#allocation5 + $0x4c] sm:$0xf]
    %v110 = vld [vmem:[#allocation5 + $0x50] sm:$0xf]
    %v111 = vld [vmem:[#allocation5 + $0x54] sm:$0xf]
    %v112 = vld [vmem:[#allocation5 + $0x58] sm:$0xf]
    %v113 = vld [vmem:[#allocation5 + $0x5c] sm:$0xf]
    %v114 = vld [vmem:[#allocation5 + $0x60] sm:$0xf]
    %v115 = vld [vmem:[#allocation5 + $0x64] sm:$0xf]
    %v116 = vld [vmem:[#allocation5 + $0x68] sm:$0xf]
    %v117 = vld [vmem:[#allocation5 + $0x6c] sm:$0xf]
    %v118 = vld [vmem:[#allocation5 + $0x70] sm:$0xf]
    %v119 = vld [vmem:[#allocation5 + $0x74] sm:$0xf]
    %v120 = vld [vmem:[#allocation5 + $0x78] sm:$0xf]
    %v121 = vld [vmem:[#allocation5 + $0x7c] sm:$0xf]
    %v122 = vld [vmem:[#allocation5 + $0x80] sm:$0xf]
    %v123 = vld [vmem:[#allocation5 + $0x84] sm:$0xf]
    %v124 = vld [vmem:[#allocation5 + $0x88] sm:$0xf]
    %v125 = vld [vmem:[#allocation5 + $0x8c] sm:$0xf]
    %v126 = vld [vmem:[#allocation5 + $0x90] sm:$0xf]
    %v127 = vld [vmem:[#allocation5 + $0x94] sm:$0xf]
    %v128 = vld [vmem:[#allocation5 + $0x98] sm:$0xf]
    %v129 = vld [vmem:[#allocation5 + $0x9c] sm:$0xf]
    %v130 = vld [vmem:[#allocation5 + $0xa0] sm:$0xf]
    %v131 = vld [vmem:[#allocation5 + $0xa4] sm:$0xf]
    %v132 = vld [vmem:[#allocation5 + $0xa8] sm:$0xf]
    %v133 = vld [vmem:[#allocation5 + $0xac] sm:$0xf]
    %v134 = vld [vmem:[#allocation5 + $0xb0] sm:$0xf]
    %v135 = vld [vmem:[#allocation5 + $0xb4] sm:$0xf]
    %v136 = vld [vmem:[#allocation5 + $0xb8] sm:$0xf]
    %v137 = vld [vmem:[#allocation5 + $0xbc] sm:$0xf]
    %v138 = vld [vmem:[#allocation5 + $0xc0] sm:$0xf]
    %v139 = vld [vmem:[#allocation5 + $0xc4] sm:$0xf]
    %v140 = vld [vmem:[#allocation5 + $0xc8] sm:$0xf]
    %v141 = vld [vmem:[#allocation5 + $0xcc] sm:$0xf]
    %v142 = vld [vmem:[#allocation5 + $0xd0] sm:$0xf]
    %v143 = vld [vmem:[#allocation5 + $0xd4] sm:$0xf]
    %v144 = vld [vmem:[#allocation5 + $0xd8] sm:$0xf]
    %v145 = vld [vmem:[#allocation5 + $0xdc] sm:$0xf]
    %v146 = vld [vmem:[#allocation5 + $0xe0] sm:$0xf]
    %v147 = vld [vmem:[#allocation5 + $0xe4] sm:$0xf]
    %v148 = vld [vmem:[#allocation5 + $0xe8] sm:$0xf]
    %v149 = vld [vmem:[#allocation5 + $0xec] sm:$0xf]
    %v150 = vld [vmem:[#allocation5 + $0xf0] sm:$0xf]
    %v151 = vld [vmem:[#allocation5 + $0xf4] sm:$0xf]
    %v152 = vld [vmem:[#allocation5 + $0xf8] sm:$0xf]
    %v153 = vld [vmem:[#allocation5 + $0xfc] sm:$0xf]
    %v154 = vld [vmem:[#allocation5 + $0x100] sm:$0xf]
    %v155 = vld [vmem:[#allocation5 + $0x104] sm:$0xf]
    %v156 = vld [vmem:[#allocation5 + $0x108] sm:$0xf]
    %v157 = vld [vmem:[#allocation5 + $0x10c] sm:$0xf]
    %v158 = vld [vmem:[#allocation5 + $0x110] sm:$0xf]
    %v159 = vld [vmem:[#allocation5 + $0x114] sm:$0xf]
    %v160 = vld [vmem:[#allocation5 + $0x118] sm:$0xf]
    %v161 = vld [vmem:[#allocation5 + $0x11c] sm:$0xf]
    %v162 = vld [vmem:[#allocation5 + $0x120] sm:$0xf]
    %v163 = vld [vmem:[#allocation5 + $0x124] sm:$0xf]
    %v164 = vld [vmem:[#allocation5 + $0x128] sm:$0xf]
    %v165 = vld [vmem:[#allocation5 + $0x12c] sm:$0xf]
    %v166 = vld [vmem:[#allocation5 + $0x130] sm:$0xf]
    %v167 = vld [vmem:[#allocation5 + $0x134] sm:$0xf]
    %v168 = vld [vmem:[#allocation5 + $0x138] sm:$0xf]
    %v169 = vld [vmem:[#allocation5 + $0x13c] sm:$0xf]
    %v170 = vld [vmem:[#allocation5 + $0x140] sm:$0xf]
    %v171 = vld [vmem:[#allocation5 + $0x144] sm:$0xf]
    %v172 = vld [vmem:[#allocation5 + $0x148] sm:$0xf]
    %v173 = vld [vmem:[#allocation5 + $0x14c] sm:$0xf]
    %v174 = vld [vmem:[#allocation5 + $0x150] sm:$0xf]
    %v175 = vld [vmem:[#allocation5 + $0x154] sm:$0xf]
    %v176 = vld [vmem:[#allocation5 + $0x158] sm:$0xf]
    %v177 = vld [vmem:[#allocation5 + $0x15c] sm:$0xf]
    %v178 = vld [vmem:[#allocation5 + $0x160] sm:$0xf]
    %v179 = vld [vmem:[#allocation5 + $0x164] sm:$0xf]
    %v180 = vld [vmem:[#allocation5 + $0x168] sm:$0xf]
    %v181 = vld [vmem:[#allocation5 + $0x16c] sm:$0xf]
    %v182 = vld [vmem:[#allocation5 + $0x170] sm:$0xf]
    %v183 = vld [vmem:[#allocation5 + $0x174] sm:$0xf]
    %v184 = vld [vmem:[#allocation5 + $0x178] sm:$0xf]
    %v185 = vld [vmem:[#allocation5 + $0x17c] sm:$0xf]
    %v186 = vld [vmem:[#allocation5 + $0x180] sm:$0xf]
    %v187 = vld [vmem:[#allocation5 + $0x184] sm:$0xf]
    %v188 = vld [vmem:[#allocation5 + $0x188] sm:$0xf]
    %v189 = vld [vmem:[#allocation5 + $0x18c] sm:$0xf]
    %v190 = vld [vmem:[#allocation5 + $0x190] sm:$0xf]
    %v191 = vld [vmem:[#allocation5 + $0x194] sm:$0xf]
    %v192 = vld [vmem:[#allocation5 + $0x198] sm:$0xf]
    %v193 = vld [vmem:[#allocation5 + $0x19c] sm:$0xf]
    %v194 = vld [vmem:[#allocation5 + $0x1a0] sm:$0xf]
    %v195 = vld [vmem:[#allocation5 + $0x1a4] sm:$0xf]
    %v196 = vld [vmem:[#allocation5 + $0x1a8] sm:$0xf]
    %v197 = vld [vmem:[#allocation5 + $0x1ac] sm:$0xf]
    %v198 = vld [vmem:[#allocation5 + $0x1b0] sm:$0xf]
    %v199 = vld [vmem:[#allocation5 + $0x1b4] sm:$0xf]
    %v200 = vld [vmem:[#allocation5 + $0x1b8] sm:$0xf]
    %v201 = vld [vmem:[#allocation5 + $0x1bc] sm:$0xf]
    %v202 = vld [vmem:[#allocation5 + $0x1c0] sm:$0xf]
    %v203 = vld [vmem:[#allocation5 + $0x1c4] sm:$0xf]
    %v204 = vld [vmem:[#allocation5 + $0x1c8] sm:$0xf]
    %v205 = vld [vmem:[#allocation5 + $0x1cc] sm:$0xf]
    %v206 = vld [vmem:[#allocation5 + $0x1d0] sm:$0xf]
    %v207 = vld [vmem:[#allocation5 + $0x1d4] sm:$0xf]
    %v208 = vld [vmem:[#allocation5 + $0x1d8] sm:$0xf]
    %v209 = vld [vmem:[#allocation5 + $0x1dc] sm:$0xf]
    %v210 = vld [vmem:[#allocation5 + $0x1e0] sm:$0xf]
    %v211 = vld [vmem:[#allocation5 + $0x1e4] sm:$0xf]
    %v212 = vld [vmem:[#allocation5 + $0x1e8] sm:$0xf]
    %v213 = vld [vmem:[#allocation5 + $0x1ec] sm:$0xf]
    %v214 = vld [vmem:[#allocation5 + $0x1f0] sm:$0xf]
    %v215 = vld [vmem:[#allocation5 + $0x1f4] sm:$0xf]
    %v216 = vld [vmem:[#allocation5 + $0x1f8] sm:$0xf]
    %v217 = vld [vmem:[#allocation5 + $0x1fc] sm:$0xf]
    %v218 = vld [vmem:[%s2] sm:$0x1]
    %v220 = vlaneseq
    %v221 = vshrl.u32 %v220, 7
    %v222 = vsub.s32 0, %v221
    %v223 = vrot.slane %v218, %v222
    %v353 = vunpack.c.l.b16 %v90
    %v354 = vunpack.c.l.b16 %v91
    %v355 = vunpack.c.l.b16 %v92
    %v356 = vunpack.c.l.b16 %v93
    %v357 = vunpack.c.l.b16 %v94
    %v358 = vunpack.c.l.b16 %v95
    %v359 = vunpack.c.l.b16 %v96
    %v360 = vunpack.c.l.b16 %v97
    %v361 = vunpack.c.l.b16 %v98
    %v362 = vunpack.c.l.b16 %v99
    %v363 = vunpack.c.l.b16 %v100
    %v364 = vunpack.c.l.b16 %v101
    %v365 = vunpack.c.l.b16 %v102
    %v366 = vunpack.c.l.b16 %v103
    %v367 = vunpack.c.l.b16 %v104
    %v368 = vunpack.c.l.b16 %v105
    %v369 = vunpack.c.l.b16 %v106
    %v370 = vunpack.c.l.b16 %v107
    %v371 = vunpack.c.l.b16 %v108
    %v372 = vunpack.c.l.b16 %v109
    %v373 = vunpack.c.l.b16 %v110
    %v374 = vunpack.c.l.b16 %v111
    %v375 = vunpack.c.l.b16 %v112
    %v376 = vunpack.c.l.b16 %v113
    %v377 = vunpack.c.l.b16 %v114
    %v378 = vunpack.c.l.b16 %v115
    %v379 = vunpack.c.l.b16 %v116
    %v380 = vunpack.c.l.b16 %v117
    %v381 = vunpack.c.l.b16 %v118
    %v382 = vunpack.c.l.b16 %v119
    %v383 = vunpack.c.l.b16 %v120
    %v384 = vunpack.c.l.b16 %v121
    %v385 = vunpack.c.l.b16 %v122
    %v386 = vunpack.c.l.b16 %v123
    %v387 = vunpack.c.l.b16 %v124
    %v388 = vunpack.c.l.b16 %v125
    %v389 = vunpack.c.l.b16 %v126
    %v390 = vunpack.c.l.b16 %v127
    %v391 = vunpack.c.l.b16 %v128
    %v392 = vunpack.c.l.b16 %v129
    %v393 = vunpack.c.l.b16 %v130
    %v394 = vunpack.c.l.b16 %v131
    %v395 = vunpack.c.l.b16 %v132
    %v396 = vunpack.c.l.b16 %v133
    %v397 = vunpack.c.l.b16 %v134
    %v398 = vunpack.c.l.b16 %v135
    %v399 = vunpack.c.l.b16 %v136
    %v400 = vunpack.c.l.b16 %v137
    %v401 = vunpack.c.l.b16 %v138
    %v402 = vunpack.c.l.b16 %v139
    %v403 = vunpack.c.l.b16 %v140
    %v404 = vunpack.c.l.b16 %v141
    %v405 = vunpack.c.l.b16 %v142
    %v406 = vunpack.c.l.b16 %v143
    %v407 = vunpack.c.l.b16 %v144
    %v408 = vunpack.c.l.b16 %v145
    %v409 = vunpack.c.l.b16 %v146
    %v410 = vunpack.c.l.b16 %v147
    %v411 = vunpack.c.l.b16 %v148
    %v412 = vunpack.c.l.b16 %v149
    %v413 = vunpack.c.l.b16 %v150
    %v414 = vunpack.c.l.b16 %v151
    %v415 = vunpack.c.l.b16 %v152
    %v416 = vunpack.c.l.b16 %v153
    %v417 = vunpack.c.l.b16 %v154
    %v418 = vunpack.c.l.b16 %v155
    %v419 = vunpack.c.l.b16 %v156
    %v420 = vunpack.c.l.b16 %v157
    %v421 = vunpack.c.l.b16 %v158
    %v422 = vunpack.c.l.b16 %v159
    %v423 = vunpack.c.l.b16 %v160
    %v424 = vunpack.c.l.b16 %v161
    %v425 = vunpack.c.l.b16 %v162
    %v426 = vunpack.c.l.b16 %v163
    %v427 = vunpack.c.l.b16 %v164
    %v428 = vunpack.c.l.b16 %v165
    %v429 = vunpack.c.l.b16 %v166
    %v430 = vunpack.c.l.b16 %v167
    %v431 = vunpack.c.l.b16 %v168
    %v432 = vunpack.c.l.b16 %v169
    %v433 = vunpack.c.l.b16 %v170
    %v434 = vunpack.c.l.b16 %v171
    %v435 = vunpack.c.l.b16 %v172
    %v436 = vunpack.c.l.b16 %v173
    %v437 = vunpack.c.l.b16 %v174
    %v438 = vunpack.c.l.b16 %v175
    %v439 = vunpack.c.l.b16 %v176
    %v440 = vunpack.c.l.b16 %v177
    %v441 = vunpack.c.l.b16 %v178
    %v442 = vunpack.c.l.b16 %v179
    %v443 = vunpack.c.l.b16 %v180
    %v444 = vunpack.c.l.b16 %v181
    %v445 = vunpack.c.l.b16 %v182
    %v446 = vunpack.c.l.b16 %v183
    %v447 = vunpack.c.l.b16 %v184
    %v448 = vunpack.c.l.b16 %v185
    %v449 = vunpack.c.l.b16 %v186
    %v450 = vunpack.c.l.b16 %v187
    %v451 = vunpack.c.l.b16 %v188
    %v452 = vunpack.c.l.b16 %v189
    %v453 = vunpack.c.l.b16 %v190
    %v454 = vunpack.c.l.b16 %v191
    %v455 = vunpack.c.l.b16 %v192
    %v456 = vunpack.c.l.b16 %v193
    %v457 = vunpack.c.l.b16 %v194
    %v458 = vunpack.c.l.b16 %v195
    %v459 = vunpack.c.l.b16 %v196
    %v460 = vunpack.c.l.b16 %v197
    %v461 = vunpack.c.l.b16 %v198
    %v462 = vunpack.c.l.b16 %v199
    %v463 = vunpack.c.l.b16 %v200
    %v464 = vunpack.c.l.b16 %v201
    %v465 = vunpack.c.l.b16 %v202
    %v466 = vunpack.c.l.b16 %v203
    %v467 = vunpack.c.l.b16 %v204
    %v468 = vunpack.c.l.b16 %v205
    %v469 = vunpack.c.l.b16 %v206
    %v470 = vunpack.c.l.b16 %v207
    %v471 = vunpack.c.l.b16 %v208
    %v472 = vunpack.c.l.b16 %v209
    %v473 = vunpack.c.l.b16 %v210
    %v474 = vunpack.c.l.b16 %v211
    %v475 = vunpack.c.l.b16 %v212
    %v476 = vunpack.c.l.b16 %v213
    %v477 = vunpack.c.l.b16 %v214
    %v478 = vunpack.c.l.b16 %v215
    %v479 = vunpack.c.l.b16 %v216
    %v480 = vunpack.c.l.b16 %v217
    %v481 = vpack.c.b16 %v354, %v353
    %v482 = vpack.c.b16 %v356, %v355
    %v483 = vpack.c.b16 %v358, %v357
    %v484 = vpack.c.b16 %v360, %v359
    %v485 = vpack.c.b16 %v362, %v361
    %v486 = vpack.c.b16 %v364, %v363
    %v487 = vpack.c.b16 %v366, %v365
    %v488 = vpack.c.b16 %v368, %v367
    %v489 = vpack.c.b16 %v370, %v369
    %v490 = vpack.c.b16 %v372, %v371
    %v491 = vpack.c.b16 %v374, %v373
    %v492 = vpack.c.b16 %v376, %v375
    %v493 = vpack.c.b16 %v378, %v377
    %v494 = vpack.c.b16 %v380, %v379
    %v495 = vpack.c.b16 %v382, %v381
    %v496 = vpack.c.b16 %v384, %v383
    %v497 = vpack.c.b16 %v386, %v385
    %v498 = vpack.c.b16 %v388, %v387
    %v499 = vpack.c.b16 %v390, %v389
    %v500 = vpack.c.b16 %v392, %v391
    %v501 = vpack.c.b16 %v394, %v393
    %v502 = vpack.c.b16 %v396, %v395
    %v503 = vpack.c.b16 %v398, %v397
    %v504 = vpack.c.b16 %v400, %v399
    %v505 = vpack.c.b16 %v402, %v401
    %v506 = vpack.c.b16 %v404, %v403
    %v507 = vpack.c.b16 %v406, %v405
    %v508 = vpack.c.b16 %v408, %v407
    %v509 = vpack.c.b16 %v410, %v409
    %v510 = vpack.c.b16 %v412, %v411
    %v511 = vpack.c.b16 %v414, %v413
    %v512 = vpack.c.b16 %v416, %v415
    %v513 = vpack.c.b16 %v418, %v417
    %v514 = vpack.c.b16 %v420, %v419
    %v515 = vpack.c.b16 %v422, %v421
    %v516 = vpack.c.b16 %v424, %v423
    %v517 = vpack.c.b16 %v426, %v425
    %v518 = vpack.c.b16 %v428, %v427
    %v519 = vpack.c.b16 %v430, %v429
    %v520 = vpack.c.b16 %v432, %v431
    %v521 = vpack.c.b16 %v434, %v433
    %v522 = vpack.c.b16 %v436, %v435
    %v523 = vpack.c.b16 %v438, %v437
    %v524 = vpack.c.b16 %v440, %v439
    %v525 = vpack.c.b16 %v442, %v441
    %v526 = vpack.c.b16 %v444, %v443
    %v527 = vpack.c.b16 %v446, %v445
    %v528 = vpack.c.b16 %v448, %v447
    %v529 = vpack.c.b16 %v450, %v449
    %v530 = vpack.c.b16 %v452, %v451
    %v531 = vpack.c.b16 %v454, %v453
    %v532 = vpack.c.b16 %v456, %v455
    %v533 = vpack.c.b16 %v458, %v457
    %v534 = vpack.c.b16 %v460, %v459
    %v535 = vpack.c.b16 %v462, %v461
    %v536 = vpack.c.b16 %v464, %v463
    %v537 = vpack.c.b16 %v466, %v465
    %v538 = vpack.c.b16 %v468, %v467
    %v539 = vpack.c.b16 %v470, %v469
    %v540 = vpack.c.b16 %v472, %v471
    %v541 = vpack.c.b16 %v474, %v473
    %v542 = vpack.c.b16 %v476, %v475
    %v543 = vpack.c.b16 %v478, %v477
    %v544 = vpack.c.b16 %v480, %v479
    %609 = vmatprep.subr.bf16.mxu0 0
    %610 = vmatpush1.bf16.msra.mxu0 %v481
    %611 = vmatprep.subr.bf16.mxu0 0
    %612 = vmatpush1.bf16.msra.mxu0 %v482
    %613 = vmatprep.subr.bf16.mxu0 0
    %614 = vmatpush1.bf16.msra.mxu0 %v483
    %615 = vmatprep.subr.bf16.mxu0 0
    %616 = vmatpush1.bf16.msra.mxu0 %v484
    %617 = vmatprep.subr.bf16.mxu0 0
    %618 = vmatpush1.bf16.msra.mxu0 %v485
    %619 = vmatprep.subr.bf16.mxu0 0
    %620 = vmatpush1.bf16.msra.mxu0 %v486
    %621 = vmatprep.subr.bf16.mxu0 0
    %622 = vmatpush1.bf16.msra.mxu0 %v487
    %623 = vmatprep.subr.bf16.mxu0 0
    %624 = vmatpush1.bf16.msra.mxu0 %v488
    %625 = vmatprep.subr.bf16.mxu0 0
    %626 = vmatpush1.bf16.msra.mxu0 %v489
    %627 = vmatprep.subr.bf16.mxu0 0
    %628 = vmatpush1.bf16.msra.mxu0 %v490
    %629 = vmatprep.subr.bf16.mxu0 0
    %630 = vmatpush1.bf16.msra.mxu0 %v491
    %631 = vmatprep.subr.bf16.mxu0 0
    %632 = vmatpush1.bf16.msra.mxu0 %v492
    %633 = vmatprep.subr.bf16.mxu0 0
    %634 = vmatpush1.bf16.msra.mxu0 %v493
    %635 = vmatprep.subr.bf16.mxu0 0
    %636 = vmatpush1.bf16.msra.mxu0 %v494
    %637 = vmatprep.subr.bf16.mxu0 0
    %638 = vmatpush1.bf16.msra.mxu0 %v495
    %639 = vmatprep.subr.bf16.mxu0 0
    %640 = vmatpush1.bf16.msra.mxu0 %v496
    %641 = vmatprep.mubr.bf16.mxu0 %v83
    %642 = vmatmul.mubr.bf16.gmra.mrb[0].mxu0 %v82
    %v643 = vpop.f32.mrb[0].mxu0
    %v644 = vadd.f32 %v223, %v643
    %v645 = vpop.f32.mrb[0].mxu0
    %v646 = vpop.f32.mrb[0].mxu0
    %v647 = vadd.f32 %v223, %v646
    %v648 = vpop.f32.mrb[0].mxu0
    %649 = vdwg.mxu0
    %650 = vmatprep.subr.bf16.mxu0 0
    %651 = vmatpush1.bf16.msra.mxu0 %v497
    %652 = vmatprep.subr.bf16.mxu0 0
    %653 = vmatpush1.bf16.msra.mxu0 %v498
    %654 = vmatprep.subr.bf16.mxu0 0
    %655 = vmatpush1.bf16.msra.mxu0 %v499
    %656 = vmatprep.subr.bf16.mxu0 0
    %657 = vmatpush1.bf16.msra.mxu0 %v500
    %658 = vmatprep.subr.bf16.mxu0 0
    %659 = vmatpush1.bf16.msra.mxu0 %v501
    %660 = vmatprep.subr.bf16.mxu0 0
    %661 = vmatpush1.bf16.msra.mxu0 %v502
    %662 = vmatprep.subr.bf16.mxu0 0
    %663 = vmatpush1.bf16.msra.mxu0 %v503
    %664 = vmatprep.subr.bf16.mxu0 0
    %665 = vmatpush1.bf16.msra.mxu0 %v504
    %666 = vmatprep.subr.bf16.mxu0 0
    %667 = vmatpush1.bf16.msra.mxu0 %v505
    %668 = vmatprep.subr.bf16.mxu0 0
    %669 = vmatpush1.bf16.msra.mxu0 %v506
    %670 = vmatprep.subr.bf16.mxu0 0
    %671 = vmatpush1.bf16.msra.mxu0 %v507
    %672 = vmatprep.subr.bf16.mxu0 0
    %673 = vmatpush1.bf16.msra.mxu0 %v508
    %674 = vmatprep.subr.bf16.mxu0 0
    %675 = vmatpush1.bf16.msra.mxu0 %v509
    %676 = vmatprep.subr.bf16.mxu0 0
    %677 = vmatpush1.bf16.msra.mxu0 %v510
    %678 = vmatprep.subr.bf16.mxu0 0
    %679 = vmatpush1.bf16.msra.mxu0 %v511
    %680 = vmatprep.subr.bf16.mxu0 0
    %681 = vmatpush1.bf16.msra.mxu0 %v512
    %682 = vmatprep.mubr.bf16.mxu0 %v85
    %683 = vmatmul.mubr.bf16.gmra.mrb[0].mxu0 %v84
    %v684 = vpop.f32.mrb[0].mxu0
    %v685 = vadd.f32 %v644, %v684
    %v686 = vpop.f32.mrb[0].mxu0
    %v687 = vpop.f32.mrb[0].mxu0
    %v688 = vadd.f32 %v647, %v687
    %v689 = vpop.f32.mrb[0].mxu0
    %690 = vdwg.mxu0
    %691 = vmatprep.subr.bf16.mxu0 0
    %692 = vmatpush1.bf16.msra.mxu0 %v513
    %693 = vmatprep.subr.bf16.mxu0 0
    %694 = vmatpush1.bf16.msra.mxu0 %v514
    %695 = vmatprep.subr.bf16.mxu0 0
    %696 = vmatpush1.bf16.msra.mxu0 %v515
    %697 = vmatprep.subr.bf16.mxu0 0
    %698 = vmatpush1.bf16.msra.mxu0 %v516
    %699 = vmatprep.subr.bf16.mxu0 0
    %700 = vmatpush1.bf16.msra.mxu0 %v517
    %701 = vmatprep.subr.bf16.mxu0 0
    %702 = vmatpush1.bf16.msra.mxu0 %v518
    %703 = vmatprep.subr.bf16.mxu0 0
    %704 = vmatpush1.bf16.msra.mxu0 %v519
    %705 = vmatprep.subr.bf16.mxu0 0
    %706 = vmatpush1.bf16.msra.mxu0 %v520
    %707 = vmatprep.subr.bf16.mxu0 0
    %708 = vmatpush1.bf16.msra.mxu0 %v521
    %709 = vmatprep.subr.bf16.mxu0 0
    %710 = vmatpush1.bf16.msra.mxu0 %v522
    %711 = vmatprep.subr.bf16.mxu0 0
    %712 = vmatpush1.bf16.msra.mxu0 %v523
    %713 = vmatprep.subr.bf16.mxu0 0
    %714 = vmatpush1.bf16.msra.mxu0 %v524
    %715 = vmatprep.subr.bf16.mxu0 0
    %716 = vmatpush1.bf16.msra.mxu0 %v525
    %717 = vmatprep.subr.bf16.mxu0 0
    %718 = vmatpush1.bf16.msra.mxu0 %v526
    %719 = vmatprep.subr.bf16.mxu0 0
    %720 = vmatpush1.bf16.msra.mxu0 %v527
    %721 = vmatprep.subr.bf16.mxu0 0
    %722 = vmatpush1.bf16.msra.mxu0 %v528
    %723 = vmatprep.mubr.bf16.mxu0 %v87
    %724 = vmatmul.mubr.bf16.gmra.mrb[0].mxu0 %v86
    %v725 = vpop.f32.mrb[0].mxu0
    %v726 = vadd.f32 %v685, %v725
    %v727 = vpop.f32.mrb[0].mxu0
    %v728 = vpop.f32.mrb[0].mxu0
    %v729 = vadd.f32 %v688, %v728
    %v730 = vpop.f32.mrb[0].mxu0
    %731 = vdwg.mxu0
    %732 = vmatprep.subr.bf16.mxu0 0
    %733 = vmatpush1.bf16.msra.mxu0 %v529
    %734 = vmatprep.subr.bf16.mxu0 0
    %735 = vmatpush1.bf16.msra.mxu0 %v530
    %736 = vmatprep.subr.bf16.mxu0 0
    %737 = vmatpush1.bf16.msra.mxu0 %v531
    %738 = vmatprep.subr.bf16.mxu0 0
    %739 = vmatpush1.bf16.msra.mxu0 %v532
    %740 = vmatprep.subr.bf16.mxu0 0
    %741 = vmatpush1.bf16.msra.mxu0 %v533
    %742 = vmatprep.subr.bf16.mxu0 0
    %743 = vmatpush1.bf16.msra.mxu0 %v534
    %744 = vmatprep.subr.bf16.mxu0 0
    %745 = vmatpush1.bf16.msra.mxu0 %v535
    %746 = vmatprep.subr.bf16.mxu0 0
    %747 = vmatpush1.bf16.msra.mxu0 %v536
    %748 = vmatprep.subr.bf16.mxu0 0
    %749 = vmatpush1.bf16.msra.mxu0 %v537
    %750 = vmatprep.subr.bf16.mxu0 0
    %751 = vmatpush1.bf16.msra.mxu0 %v538
    %752 = vmatprep.subr.bf16.mxu0 0
    %753 = vmatpush1.bf16.msra.mxu0 %v539
    %754 = vmatprep.subr.bf16.mxu0 0
    %755 = vmatpush1.bf16.msra.mxu0 %v540
    %756 = vmatprep.subr.bf16.mxu0 0
    %757 = vmatpush1.bf16.msra.mxu0 %v541
    %758 = vmatprep.subr.bf16.mxu0 0
    %759 = vmatpush1.bf16.msra.mxu0 %v542
    %760 = vmatprep.subr.bf16.mxu0 0
    %761 = vmatpush1.bf16.msra.mxu0 %v543
    %762 = vmatprep.subr.bf16.mxu0 0
    %763 = vmatpush1.bf16.msra.mxu0 %v544
    %764 = vmatprep.mubr.bf16.mxu0 %v89
    %765 = vmatmul.mubr.bf16.gmra.mrb[0].mxu0 %v88
    %v766 = vpop.f32.mrb[0].mxu0
    %v767 = vadd.f32 %v726, %v766
    %v768 = vpop.f32.mrb[0].mxu0
    %v769 = vpop.f32.mrb[0].mxu0
    %v770 = vadd.f32 %v729, %v769
    %v771 = vpop.f32.mrb[0].mxu0
    %772 = vdwg.mxu0
    %v773 = vmax.f32 %v767, 0.0
    %v774 = vmax.f32 %v770, 0.0
    %v775 = vpack.c.bf16 %v774, %v773
    %v777 = vunpack.c.l.b16 %v775
    %v778 = vunpack.c.h.b16 %v775
    %v779 = vpack.c.b16 %v777, %v777
    %v780 = vpack.c.b16 %v778, %v778
    %783 = vst [vmem:[#allocation8] sm:$0xf] %v779
    %784 = vst [vmem:[#allocation8 + $0x4] sm:$0xf] %v780
    %v785 = vld [vmem:[#allocation7] sm:$0xff]
    %v786 = vld [vmem:[#allocation7 + $0x8] sm:$0xff]
    %v787 = vld [vmem:[#allocation7 + $0x10] sm:$0xff]
    %v788 = vld [vmem:[#allocation7 + $0x18] sm:$0xff]
    %v789 = vld [vmem:[#allocation7 + $0x20] sm:$0xff]
    %v790 = vld [vmem:[#allocation7 + $0x28] sm:$0xff]
    %v791 = vld [vmem:[#allocation7 + $0x30] sm:$0xff]
    %v792 = vld [vmem:[#allocation7 + $0x38] sm:$0xff]
    %v793 = vld [vmem:[#allocation7 + $0x40] sm:$0xff]
    %v794 = vld [vmem:[#allocation7 + $0x48] sm:$0xff]
    %v795 = vld [vmem:[#allocation7 + $0x50] sm:$0xff]
    %v796 = vld [vmem:[#allocation7 + $0x58] sm:$0xff]
    %v797 = vld [vmem:[#allocation7 + $0x60] sm:$0xff]
    %v798 = vld [vmem:[#allocation7 + $0x68] sm:$0xff]
    %v799 = vld [vmem:[#allocation7 + $0x70] sm:$0xff]
    %v800 = vld [vmem:[#allocation7 + $0x78] sm:$0xff]
    %v801 = vld [vmem:[#allocation7 + $0x80] sm:$0xff]
    %v802 = vld [vmem:[#allocation7 + $0x88] sm:$0xff]
    %v803 = vld [vmem:[#allocation7 + $0x90] sm:$0xff]
    %v804 = vld [vmem:[#allocation7 + $0x98] sm:$0xff]
    %v805 = vld [vmem:[#allocation7 + $0xa0] sm:$0xff]
    %v806 = vld [vmem:[#allocation7 + $0xa8] sm:$0xff]
    %v807 = vld [vmem:[#allocation7 + $0xb0] sm:$0xff]
    %v808 = vld [vmem:[#allocation7 + $0xb8] sm:$0xff]
    %v809 = vld [vmem:[#allocation7 + $0xc0] sm:$0xff]
    %v810 = vld [vmem:[#allocation7 + $0xc8] sm:$0xff]
    %v811 = vld [vmem:[#allocation7 + $0xd0] sm:$0xff]
    %v812 = vld [vmem:[#allocation7 + $0xd8] sm:$0xff]
    %v813 = vld [vmem:[#allocation7 + $0xe0] sm:$0xff]
    %v814 = vld [vmem:[#allocation7 + $0xe8] sm:$0xff]
    %v815 = vld [vmem:[#allocation7 + $0xf0] sm:$0xff]
    %v816 = vld [vmem:[#allocation7 + $0xf8] sm:$0xff]
    %v817 = vld [vmem:[#allocation7 + $0x100] sm:$0xff]
    %v818 = vld [vmem:[#allocation7 + $0x108] sm:$0xff]
    %v819 = vld [vmem:[#allocation7 + $0x110] sm:$0xff]
    %v820 = vld [vmem:[#allocation7 + $0x118] sm:$0xff]
    %v821 = vld [vmem:[#allocation7 + $0x120] sm:$0xff]
    %v822 = vld [vmem:[#allocation7 + $0x128] sm:$0xff]
    %v823 = vld [vmem:[#allocation7 + $0x130] sm:$0xff]
    %v824 = vld [vmem:[#allocation7 + $0x138] sm:$0xff]
    %v825 = vld [vmem:[#allocation7 + $0x140] sm:$0xff]
    %v826 = vld [vmem:[#allocation7 + $0x148] sm:$0xff]
    %v827 = vld [vmem:[#allocation7 + $0x150] sm:$0xff]
    %v828 = vld [vmem:[#allocation7 + $0x158] sm:$0xff]
    %v829 = vld [vmem:[#allocation7 + $0x160] sm:$0xff]
    %v830 = vld [vmem:[#allocation7 + $0x168] sm:$0xff]
    %v831 = vld [vmem:[#allocation7 + $0x170] sm:$0xff]
    %v832 = vld [vmem:[#allocation7 + $0x178] sm:$0xff]
    %v833 = vld [vmem:[#allocation7 + $0x180] sm:$0xff]
    %v834 = vld [vmem:[#allocation7 + $0x188] sm:$0xff]
    %v835 = vld [vmem:[#allocation7 + $0x190] sm:$0xff]
    %v836 = vld [vmem:[#allocation7 + $0x198] sm:$0xff]
    %v837 = vld [vmem:[#allocation7 + $0x1a0] sm:$0xff]
    %v838 = vld [vmem:[#allocation7 + $0x1a8] sm:$0xff]
    %v839 = vld [vmem:[#allocation7 + $0x1b0] sm:$0xff]
    %v840 = vld [vmem:[#allocation7 + $0x1b8] sm:$0xff]
    %v841 = vld [vmem:[#allocation7 + $0x1c0] sm:$0xff]
    %v842 = vld [vmem:[#allocation7 + $0x1c8] sm:$0xff]
    %v843 = vld [vmem:[#allocation7 + $0x1d0] sm:$0xff]
    %v844 = vld [vmem:[#allocation7 + $0x1d8] sm:$0xff]
    %v845 = vld [vmem:[#allocation7 + $0x1e0] sm:$0xff]
    %v846 = vld [vmem:[#allocation7 + $0x1e8] sm:$0xff]
    %v847 = vld [vmem:[#allocation7 + $0x1f0] sm:$0xff]
    %v848 = vld [vmem:[#allocation7 + $0x1f8] sm:$0xff]
    %v849 = vld [vmem:[%s4] sm:$0xff]
    %v851 = vlaneseq
    %v852 = vshrl.u32 %v851, 7
    %v853 = vsub.s32 0, %v852
    %v854 = vrot.slane %v849, %v853
    %v855 = vlaneseq
    %v856 = vshrl.u32 %v855, 7
    %v857 = vsub.s32 1, %v856
    %v858 = vrot.slane %v849, %v857
    %v859 = vlaneseq
    %v860 = vshrl.u32 %v859, 7
    %v861 = vsub.s32 2, %v860
    %v862 = vrot.slane %v849, %v861
    %v863 = vlaneseq
    %v864 = vshrl.u32 %v863, 7
    %v865 = vsub.s32 3, %v864
    %v866 = vrot.slane %v849, %v865
    %v867 = vlaneseq
    %v868 = vshrl.u32 %v867, 7
    %v869 = vsub.s32 4, %v868
    %v870 = vrot.slane %v849, %v869
    %v871 = vlaneseq
    %v872 = vshrl.u32 %v871, 7
    %v873 = vsub.s32 5, %v872
    %v874 = vrot.slane %v849, %v873
    %v875 = vlaneseq
    %v876 = vshrl.u32 %v875, 7
    %v877 = vsub.s32 6, %v876
    %v878 = vrot.slane %v849, %v877
    %v879 = vlaneseq
    %v880 = vshrl.u32 %v879, 7
    %v881 = vsub.s32 7, %v880
    %v882 = vrot.slane %v849, %v881
    %v955 = vunpack.c.l.b16 %v785
    %v956 = vunpack.c.h.b16 %v785
    %v957 = vunpack.c.l.b16 %v786
    %v958 = vunpack.c.h.b16 %v786
    %v959 = vunpack.c.l.b16 %v787
    %v960 = vunpack.c.h.b16 %v787
    %v961 = vunpack.c.l.b16 %v788
    %v962 = vunpack.c.h.b16 %v788
    %v963 = vunpack.c.l.b16 %v789
    %v964 = vunpack.c.h.b16 %v789
    %v965 = vunpack.c.l.b16 %v790
    %v966 = vunpack.c.h.b16 %v790
    %v967 = vunpack.c.l.b16 %v791
    %v968 = vunpack.c.h.b16 %v791
    %v969 = vunpack.c.l.b16 %v792
    %v970 = vunpack.c.h.b16 %v792
    %v971 = vunpack.c.l.b16 %v793
    %v972 = vunpack.c.h.b16 %v793
    %v973 = vunpack.c.l.b16 %v794
    %v974 = vunpack.c.h.b16 %v794
    %v975 = vunpack.c.l.b16 %v795
    %v976 = vunpack.c.h.b16 %v795
    %v977 = vunpack.c.l.b16 %v796
    %v978 = vunpack.c.h.b16 %v796
    %v979 = vunpack.c.l.b16 %v797
    %v980 = vunpack.c.h.b16 %v797
    %v981 = vunpack.c.l.b16 %v798
    %v982 = vunpack.c.h.b16 %v798
    %v983 = vunpack.c.l.b16 %v799
    %v984 = vunpack.c.h.b16 %v799
    %v985 = vunpack.c.l.b16 %v800
    %v986 = vunpack.c.h.b16 %v800
    %v987 = vunpack.c.l.b16 %v801
    %v988 = vunpack.c.h.b16 %v801
    %v989 = vunpack.c.l.b16 %v802
    %v990 = vunpack.c.h.b16 %v802
    %v991 = vunpack.c.l.b16 %v803
    %v992 = vunpack.c.h.b16 %v803
    %v993 = vunpack.c.l.b16 %v804
    %v994 = vunpack.c.h.b16 %v804
    %v995 = vunpack.c.l.b16 %v805
    %v996 = vunpack.c.h.b16 %v805
    %v997 = vunpack.c.l.b16 %v806
    %v998 = vunpack.c.h.b16 %v806
    %v999 = vunpack.c.l.b16 %v807
    %v1000 = vunpack.c.h.b16 %v807
    %v1001 = vunpack.c.l.b16 %v808
    %v1002 = vunpack.c.h.b16 %v808
    %v1003 = vunpack.c.l.b16 %v809
    %v1004 = vunpack.c.h.b16 %v809
    %v1005 = vunpack.c.l.b16 %v810
    %v1006 = vunpack.c.h.b16 %v810
    %v1007 = vunpack.c.l.b16 %v811
    %v1008 = vunpack.c.h.b16 %v811
    %v1009 = vunpack.c.l.b16 %v812
    %v1010 = vunpack.c.h.b16 %v812
    %v1011 = vunpack.c.l.b16 %v813
    %v1012 = vunpack.c.h.b16 %v813
    %v1013 = vunpack.c.l.b16 %v814
    %v1014 = vunpack.c.h.b16 %v814
    %v1015 = vunpack.c.l.b16 %v815
    %v1016 = vunpack.c.h.b16 %v815
    %v1017 = vunpack.c.l.b16 %v816
    %v1018 = vunpack.c.h.b16 %v816
    %v1019 = vunpack.c.l.b16 %v817
    %v1020 = vunpack.c.h.b16 %v817
    %v1021 = vunpack.c.l.b16 %v818
    %v1022 = vunpack.c.h.b16 %v818
    %v1023 = vunpack.c.l.b16 %v819
    %v1024 = vunpack.c.h.b16 %v819
    %v1025 = vunpack.c.l.b16 %v820
    %v1026 = vunpack.c.h.b16 %v820
    %v1027 = vunpack.c.l.b16 %v821
    %v1028 = vunpack.c.h.b16 %v821
    %v1029 = vunpack.c.l.b16 %v822
    %v1030 = vunpack.c.h.b16 %v822
    %v1031 = vunpack.c.l.b16 %v823
    %v1032 = vunpack.c.h.b16 %v823
    %v1033 = vunpack.c.l.b16 %v824
    %v1034 = vunpack.c.h.b16 %v824
    %v1035 = vunpack.c.l.b16 %v825
    %v1036 = vunpack.c.h.b16 %v825
    %v1037 = vunpack.c.l.b16 %v826
    %v1038 = vunpack.c.h.b16 %v826
    %v1039 = vunpack.c.l.b16 %v827
    %v1040 = vunpack.c.h.b16 %v827
    %v1041 = vunpack.c.l.b16 %v828
    %v1042 = vunpack.c.h.b16 %v828
    %v1043 = vunpack.c.l.b16 %v829
    %v1044 = vunpack.c.h.b16 %v829
    %v1045 = vunpack.c.l.b16 %v830
    %v1046 = vunpack.c.h.b16 %v830
    %v1047 = vunpack.c.l.b16 %v831
    %v1048 = vunpack.c.h.b16 %v831
    %v1049 = vunpack.c.l.b16 %v832
    %v1050 = vunpack.c.h.b16 %v832
    %v1051 = vunpack.c.l.b16 %v833
    %v1052 = vunpack.c.h.b16 %v833
    %v1053 = vunpack.c.l.b16 %v834
    %v1054 = vunpack.c.h.b16 %v834
    %v1055 = vunpack.c.l.b16 %v835
    %v1056 = vunpack.c.h.b16 %v835
    %v1057 = vunpack.c.l.b16 %v836
    %v1058 = vunpack.c.h.b16 %v836
    %v1059 = vunpack.c.l.b16 %v837
    %v1060 = vunpack.c.h.b16 %v837
    %v1061 = vunpack.c.l.b16 %v838
    %v1062 = vunpack.c.h.b16 %v838
    %v1063 = vunpack.c.l.b16 %v839
    %v1064 = vunpack.c.h.b16 %v839
    %v1065 = vunpack.c.l.b16 %v840
    %v1066 = vunpack.c.h.b16 %v840
    %v1067 = vunpack.c.l.b16 %v841
    %v1068 = vunpack.c.h.b16 %v841
    %v1069 = vunpack.c.l.b16 %v842
    %v1070 = vunpack.c.h.b16 %v842
    %v1071 = vunpack.c.l.b16 %v843
    %v1072 = vunpack.c.h.b16 %v843
    %v1073 = vunpack.c.l.b16 %v844
    %v1074 = vunpack.c.h.b16 %v844
    %v1075 = vunpack.c.l.b16 %v845
    %v1076 = vunpack.c.h.b16 %v845
    %v1077 = vunpack.c.l.b16 %v846
    %v1078 = vunpack.c.h.b16 %v846
    %v1079 = vunpack.c.l.b16 %v847
    %v1080 = vunpack.c.h.b16 %v847
    %v1081 = vunpack.c.l.b16 %v848
    %v1082 = vunpack.c.h.b16 %v848
    %v1083 = vpack.c.b16 %v963, %v955
    %v1084 = vpack.c.b16 %v964, %v956
    %v1085 = vpack.c.b16 %v965, %v957
    %v1086 = vpack.c.b16 %v966, %v958
    %v1087 = vpack.c.b16 %v967, %v959
    %v1088 = vpack.c.b16 %v968, %v960
    %v1089 = vpack.c.b16 %v969, %v961
    %v1090 = vpack.c.b16 %v970, %v962
    %v1091 = vpack.c.b16 %v979, %v971
    %v1092 = vpack.c.b16 %v980, %v972
    %v1093 = vpack.c.b16 %v981, %v973
    %v1094 = vpack.c.b16 %v982, %v974
    %v1095 = vpack.c.b16 %v983, %v975
    %v1096 = vpack.c.b16 %v984, %v976
    %v1097 = vpack.c.b16 %v985, %v977
    %v1098 = vpack.c.b16 %v986, %v978
    %v1099 = vpack.c.b16 %v995, %v987
    %v1100 = vpack.c.b16 %v996, %v988
    %v1101 = vpack.c.b16 %v997, %v989
    %v1102 = vpack.c.b16 %v998, %v990
    %v1103 = vpack.c.b16 %v999, %v991
    %v1104 = vpack.c.b16 %v1000, %v992
    %v1105 = vpack.c.b16 %v1001, %v993
    %v1106 = vpack.c.b16 %v1002, %v994
    %v1107 = vpack.c.b16 %v1011, %v1003
    %v1108 = vpack.c.b16 %v1012, %v1004
    %v1109 = vpack.c.b16 %v1013, %v1005
    %v1110 = vpack.c.b16 %v1014, %v1006
    %v1111 = vpack.c.b16 %v1015, %v1007
    %v1112 = vpack.c.b16 %v1016, %v1008
    %v1113 = vpack.c.b16 %v1017, %v1009
    %v1114 = vpack.c.b16 %v1018, %v1010
    %v1115 = vpack.c.b16 %v1027, %v1019
    %v1116 = vpack.c.b16 %v1028, %v1020
    %v1117 = vpack.c.b16 %v1029, %v1021
    %v1118 = vpack.c.b16 %v1030, %v1022
    %v1119 = vpack.c.b16 %v1031, %v1023
    %v1120 = vpack.c.b16 %v1032, %v1024
    %v1121 = vpack.c.b16 %v1033, %v1025
    %v1122 = vpack.c.b16 %v1034, %v1026
    %v1123 = vpack.c.b16 %v1043, %v1035
    %v1124 = vpack.c.b16 %v1044, %v1036
    %v1125 = vpack.c.b16 %v1045, %v1037
    %v1126 = vpack.c.b16 %v1046, %v1038
    %v1127 = vpack.c.b16 %v1047, %v1039
    %v1128 = vpack.c.b16 %v1048, %v1040
    %v1129 = vpack.c.b16 %v1049, %v1041
    %v1130 = vpack.c.b16 %v1050, %v1042
    %v1131 = vpack.c.b16 %v1059, %v1051
    %v1132 = vpack.c.b16 %v1060, %v1052
    %v1133 = vpack.c.b16 %v1061, %v1053
    %v1134 = vpack.c.b16 %v1062, %v1054
    %v1135 = vpack.c.b16 %v1063, %v1055
    %v1136 = vpack.c.b16 %v1064, %v1056
    %v1137 = vpack.c.b16 %v1065, %v1057
    %v1138 = vpack.c.b16 %v1066, %v1058
    %v1139 = vpack.c.b16 %v1075, %v1067
    %v1140 = vpack.c.b16 %v1076, %v1068
    %v1141 = vpack.c.b16 %v1077, %v1069
    %v1142 = vpack.c.b16 %v1078, %v1070
    %v1143 = vpack.c.b16 %v1079, %v1071
    %v1144 = vpack.c.b16 %v1080, %v1072
    %v1145 = vpack.c.b16 %v1081, %v1073
    %v1146 = vpack.c.b16 %v1082, %v1074
    %1211 = vmatprep.subr.bf16.mxu0 %v1084
    %1212 = vmatpush1.bf16.msra.mxu0 %v1083
    %1213 = vmatprep.subr.bf16.mxu0 %v1092
    %1214 = vmatpush1.bf16.msra.mxu0 %v1091
    %1215 = vmatprep.subr.bf16.mxu0 %v1100
    %1216 = vmatpush1.bf16.msra.mxu0 %v1099
    %1217 = vmatprep.subr.bf16.mxu0 %v1108
    %1218 = vmatpush1.bf16.msra.mxu0 %v1107
    %1219 = vmatprep.subr.bf16.mxu0 %v1116
    %1220 = vmatpush1.bf16.msra.mxu0 %v1115
    %1221 = vmatprep.subr.bf16.mxu0 %v1124
    %1222 = vmatpush1.bf16.msra.mxu0 %v1123
    %1223 = vmatprep.subr.bf16.mxu0 %v1132
    %1224 = vmatpush1.bf16.msra.mxu0 %v1131
    %1225 = vmatprep.subr.bf16.mxu0 %v1140
    %1226 = vmatpush1.bf16.msra.mxu0 %v1139
    %1227 = vmatprep.subr.bf16.mxu0 0
    %1228 = vmatpush1.bf16.msra.mxu0 0
    %1229 = vmatprep.subr.bf16.mxu0 0
    %1230 = vmatpush1.bf16.msra.mxu0 0
    %1231 = vmatprep.subr.bf16.mxu0 0
    %1232 = vmatpush1.bf16.msra.mxu0 0
    %1233 = vmatprep.subr.bf16.mxu0 0
    %1234 = vmatpush1.bf16.msra.mxu0 0
    %1235 = vmatprep.subr.bf16.mxu0 0
    %1236 = vmatpush1.bf16.msra.mxu0 0
    %1237 = vmatprep.subr.bf16.mxu0 0
    %1238 = vmatpush1.bf16.msra.mxu0 0
    %1239 = vmatprep.subr.bf16.mxu0 0
    %1240 = vmatpush1.bf16.msra.mxu0 0
    %1241 = vmatprep.subr.bf16.mxu0 0
    %1242 = vmatpush1.bf16.msra.mxu0 0
    %1243 = vmatprep.mubr.bf16.mxu0 0
    %1244 = vmatmul.mubr.bf16.gmra.mrb[0].mxu0 %v775
    %v1245 = vpop.f32.mrb[0].mxu0
    %v1246 = vadd.f32 %v854, %v1245
    %v1247 = vpop.f32.mrb[0].mxu0
    %v1248 = vadd.f32 %v858, %v1247
    %v1249 = vpop.f32.mrb[0].mxu0
    %v1250 = vadd.f32 %v854, %v1249
    %v1251 = vpop.f32.mrb[0].mxu0
    %v1252 = vadd.f32 %v858, %v1251
    %1253 = vdwg.mxu0
    %1254 = vmatprep.subr.bf16.mxu0 %v1086
    %1255 = vmatpush1.bf16.msra.mxu0 %v1085
    %1256 = vmatprep.subr.bf16.mxu0 %v1094
    %1257 = vmatpush1.bf16.msra.mxu0 %v1093
    %1258 = vmatprep.subr.bf16.mxu0 %v1102
    %1259 = vmatpush1.bf16.msra.mxu0 %v1101
    %1260 = vmatprep.subr.bf16.mxu0 %v1110
    %1261 = vmatpush1.bf16.msra.mxu0 %v1109
    %1262 = vmatprep.subr.bf16.mxu0 %v1118
    %1263 = vmatpush1.bf16.msra.mxu0 %v1117
    %1264 = vmatprep.subr.bf16.mxu0 %v1126
    %1265 = vmatpush1.bf16.msra.mxu0 %v1125
    %1266 = vmatprep.subr.bf16.mxu0 %v1134
    %1267 = vmatpush1.bf16.msra.mxu0 %v1133
    %1268 = vmatprep.subr.bf16.mxu0 %v1142
    %1269 = vmatpush1.bf16.msra.mxu0 %v1141
    %1270 = vmatprep.subr.bf16.mxu0 0
    %1271 = vmatpush1.bf16.msra.mxu0 0
    %1272 = vmatprep.subr.bf16.mxu0 0
    %1273 = vmatpush1.bf16.msra.mxu0 0
    %1274 = vmatprep.subr.bf16.mxu0 0
    %1275 = vmatpush1.bf16.msra.mxu0 0
    %1276 = vmatprep.subr.bf16.mxu0 0
    %1277 = vmatpush1.bf16.msra.mxu0 0
    %1278 = vmatprep.subr.bf16.mxu0 0
    %1279 = vmatpush1.bf16.msra.mxu0 0
    %1280 = vmatprep.subr.bf16.mxu0 0
    %1281 = vmatpush1.bf16.msra.mxu0 0
    %1282 = vmatprep.subr.bf16.mxu0 0
    %1283 = vmatpush1.bf16.msra.mxu0 0
    %1284 = vmatprep.subr.bf16.mxu0 0
    %1285 = vmatpush1.bf16.msra.mxu0 0
    %1286 = vmatprep.mubr.bf16.mxu0 0
    %1287 = vmatmul.mubr.bf16.gmra.mrb[0].mxu0 %v775
    %v1288 = vpop.f32.mrb[0].mxu0
    %v1289 = vadd.f32 %v862, %v1288
    %v1290 = vpop.f32.mrb[0].mxu0
    %v1291 = vadd.f32 %v866, %v1290
    %v1292 = vpop.f32.mrb[0].mxu0
    %v1293 = vadd.f32 %v862, %v1292
    %v1294 = vpop.f32.mrb[0].mxu0
    %v1295 = vadd.f32 %v866, %v1294
    %1296 = vdwg.mxu0
    %1297 = vmatprep.subr.bf16.mxu0 %v1088
    %1298 = vmatpush1.bf16.msra.mxu0 %v1087
    %1299 = vmatprep.subr.bf16.mxu0 %v1096
    %1300 = vmatpush1.bf16.msra.mxu0 %v1095
    %1301 = vmatprep.subr.bf16.mxu0 %v1104
    %1302 = vmatpush1.bf16.msra.mxu0 %v1103
    %1303 = vmatprep.subr.bf16.mxu0 %v1112
    %1304 = vmatpush1.bf16.msra.mxu0 %v1111
    %1305 = vmatprep.subr.bf16.mxu0 %v1120
    %1306 = vmatpush1.bf16.msra.mxu0 %v1119
    %1307 = vmatprep.subr.bf16.mxu0 %v1128
    %1308 = vmatpush1.bf16.msra.mxu0 %v1127
    %1309 = vmatprep.subr.bf16.mxu0 %v1136
    %1310 = vmatpush1.bf16.msra.mxu0 %v1135
    %1311 = vmatprep.subr.bf16.mxu0 %v1144
    %1312 = vmatpush1.bf16.msra.mxu0 %v1143
    %1313 = vmatprep.subr.bf16.mxu0 0
    %1314 = vmatpush1.bf16.msra.mxu0 0
    %1315 = vmatprep.subr.bf16.mxu0 0
    %1316 = vmatpush1.bf16.msra.mxu0 0
    %1317 = vmatprep.subr.bf16.mxu0 0
    %1318 = vmatpush1.bf16.msra.mxu0 0
    %1319 = vmatprep.subr.bf16.mxu0 0
    %1320 = vmatpush1.bf16.msra.mxu0 0
    %1321 = vmatprep.subr.bf16.mxu0 0
    %1322 = vmatpush1.bf16.msra.mxu0 0
    %1323 = vmatprep.subr.bf16.mxu0 0
    %1324 = vmatpush1.bf16.msra.mxu0 0
    %1325 = vmatprep.subr.bf16.mxu0 0
    %1326 = vmatpush1.bf16.msra.mxu0 0
    %1327 = vmatprep.subr.bf16.mxu0 0
    %1328 = vmatpush1.bf16.msra.mxu0 0
    %1329 = vmatprep.mubr.bf16.mxu0 0
    %1330 = vmatmul.mubr.bf16.gmra.mrb[0].mxu0 %v775
    %v1331 = vpop.f32.mrb[0].mxu0
    %v1332 = vadd.f32 %v870, %v1331
    %v1333 = vpop.f32.mrb[0].mxu0
    %v1334 = vadd.f32 %v874, %v1333
    %v1335 = vpop.f32.mrb[0].mxu0
    %v1336 = vadd.f32 %v870, %v1335
    %v1337 = vpop.f32.mrb[0].mxu0
    %v1338 = vadd.f32 %v874, %v1337
    %1339 = vdwg.mxu0
    %1340 = vmatprep.subr.bf16.mxu0 %v1090
    %1341 = vmatpush1.bf16.msra.mxu0 %v1089
    %1342 = vmatprep.subr.bf16.mxu0 %v1098
    %1343 = vmatpush1.bf16.msra.mxu0 %v1097
    %1344 = vmatprep.subr.bf16.mxu0 %v1106
    %1345 = vmatpush1.bf16.msra.mxu0 %v1105
    %1346 = vmatprep.subr.bf16.mxu0 %v1114
    %1347 = vmatpush1.bf16.msra.mxu0 %v1113
    %1348 = vmatprep.subr.bf16.mxu0 %v1122
    %1349 = vmatpush1.bf16.msra.mxu0 %v1121
    %1350 = vmatprep.subr.bf16.mxu0 %v1130
    %1351 = vmatpush1.bf16.msra.mxu0 %v1129
    %1352 = vmatprep.subr.bf16.mxu0 %v1138
    %1353 = vmatpush1.bf16.msra.mxu0 %v1137
    %1354 = vmatprep.subr.bf16.mxu0 %v1146
    %1355 = vmatpush1.bf16.msra.mxu0 %v1145
    %1356 = vmatprep.subr.bf16.mxu0 0
    %1357 = vmatpush1.bf16.msra.mxu0 0
    %1358 = vmatprep.subr.bf16.mxu0 0
    %1359 = vmatpush1.bf16.msra.mxu0 0
    %1360 = vmatprep.subr.bf16.mxu0 0
    %1361 = vmatpush1.bf16.msra.mxu0 0
    %1362 = vmatprep.subr.bf16.mxu0 0
    %1363 = vmatpush1.bf16.msra.mxu0 0
    %1364 = vmatprep.subr.bf16.mxu0 0
    %1365 = vmatpush1.bf16.msra.mxu0 0
    %1366 = vmatprep.subr.bf16.mxu0 0
    %1367 = vmatpush1.bf16.msra.mxu0 0
    %1368 = vmatprep.subr.bf16.mxu0 0
    %1369 = vmatpush1.bf16.msra.mxu0 0
    %1370 = vmatprep.subr.bf16.mxu0 0
    %1371 = vmatpush1.bf16.msra.mxu0 0
    %1372 = vmatprep.mubr.bf16.mxu0 0
    %1373 = vmatmul.mubr.bf16.gmra.mrb[0].mxu0 %v775
    %v1374 = vpop.f32.mrb[0].mxu0
    %v1375 = vadd.f32 %v878, %v1374
    %v1376 = vpop.f32.mrb[0].mxu0
    %v1377 = vadd.f32 %v882, %v1376
    %v1378 = vpop.f32.mrb[0].mxu0
    %v1379 = vadd.f32 %v878, %v1378
    %v1380 = vpop.f32.mrb[0].mxu0
    %v1381 = vadd.f32 %v882, %v1380
    %1382 = vdwg.mxu0
    %v1383 = vpack.c.bf16 %v1250, %v1246
    %v1384 = vpack.c.bf16 %v1252, %v1248
    %v1385 = vpack.c.bf16 %v1293, %v1289
    %v1386 = vpack.c.bf16 %v1295, %v1291
    %v1387 = vpack.c.bf16 %v1336, %v1332
    %v1388 = vpack.c.bf16 %v1338, %v1334
    %v1389 = vpack.c.bf16 %v1379, %v1375
    %v1390 = vpack.c.bf16 %v1381, %v1377
    %v1399 = vunpack.c.l.b16 %v1383
    %v1400 = vunpack.c.l.b16 %v1384
    %v1401 = vunpack.c.l.b16 %v1385
    %v1402 = vunpack.c.l.b16 %v1386
    %v1403 = vunpack.c.l.b16 %v1387
    %v1404 = vunpack.c.l.b16 %v1388
    %v1405 = vunpack.c.l.b16 %v1389
    %v1406 = vunpack.c.l.b16 %v1390
    %v1407 = vunpack.c.h.b16 %v1383
    %v1408 = vunpack.c.h.b16 %v1384
    %v1409 = vunpack.c.h.b16 %v1385
    %v1410 = vunpack.c.h.b16 %v1386
    %v1411 = vunpack.c.h.b16 %v1387
    %v1412 = vunpack.c.h.b16 %v1388
    %v1413 = vunpack.c.h.b16 %v1389
    %v1414 = vunpack.c.h.b16 %v1390
    %v1415 = vpack.c.b16 %v1400, %v1399
    %v1416 = vpack.c.b16 %v1402, %v1401
    %v1417 = vpack.c.b16 %v1404, %v1403
    %v1418 = vpack.c.b16 %v1406, %v1405
    %v1419 = vpack.c.b16 %v1408, %v1407
    %v1420 = vpack.c.b16 %v1410, %v1409
    %v1421 = vpack.c.b16 %v1412, %v1411
    %v1422 = vpack.c.b16 %v1414, %v1413
    %1431 = vst [vmem:[#allocation9] sm:$0xff] %v1415
    %1432 = vst [vmem:[#allocation9 + $0x8] sm:$0xff] %v1416
    %1433 = vst [vmem:[#allocation9 + $0x10] sm:$0xff] %v1417
    %1434 = vst [vmem:[#allocation9 + $0x18] sm:$0xff] %v1418
    %1435 = vst [vmem:[#allocation9 + $0x20] sm:$0xff] %v1419
    %1436 = vst [vmem:[#allocation9 + $0x28] sm:$0xff] %v1420
    %1437 = vst [vmem:[#allocation9 + $0x30] sm:$0xff] %v1421
    %1438 = vst [vmem:[#allocation9 + $0x38] sm:$0xff] %v1422
    // Predicated region
    $region34: #{tpu_custom_call.1} parent=1 // pred_check
      _
    $region35: #{tpu_custom_call.1} parent=1 // pred_check_branch
      %1440 = sbr.rel (0) target = $region37
    $region36: #{tpu_custom_call.1} parent=1 // pred_region
      %s1442 = ssub.s32 128, 128
      %1443 = vsyncadd [#allocation4], %s1442
      %s1444 = sshll.u32 [#allocation8], 4
      %s1445 = int_to_ptr.vmem [resolvable:$true] %s1444
      %1450 = dma.vmem_to_hbm [thread:$0]  %s1445, 128, %s5, [#allocation4], 64, 64, 4
    $region37: #{tpu_custom_call.1} parent=1 // pred_fallthru
      _
    // Predicated region
    $region38: #{tpu_custom_call.1} parent=1 // pred_check
      _
    $region39: #{tpu_custom_call.1} parent=1 // pred_check_branch
      %1452 = sbr.rel (0) target = $region41
    $region40: #{tpu_custom_call.1} parent=1 // pred_region
      %s1454 = ssub.s32 1024, 1024
      %1455 = vsyncadd [#allocation10], %s1454
      %s1456 = sshll.u32 [#allocation9], 4
      %s1457 = int_to_ptr.vmem [resolvable:$true] %s1456
      %1462 = dma.vmem_to_hbm [thread:$0]  %s1457, 1024, %s6, [#allocation10], 512, 512, 32
    $region41: #{tpu_custom_call.1} parent=1 // pred_fallthru
      _
    // Predicated region
    $region42: #{tpu_custom_call.1} parent=1 // pred_check
      _
    $region43: #{tpu_custom_call.1} parent=1 // pred_check_branch
      %1464 = sbr.rel (0) target = $region45
    $region44: #{tpu_custom_call.1} parent=1 // pred_region
      %1465 = dma.done [#allocation4], 128
    $region45: #{tpu_custom_call.1} parent=1 // pred_fallthru
      _
    // Predicated region
    $region46: #{tpu_custom_call.1} parent=1 // pred_check
      _
    $region47: #{tpu_custom_call.1} parent=1 // pred_check_branch
      %1467 = sbr.rel (0) target = $region49
    $region48: #{tpu_custom_call.1} parent=1 // pred_region
      %1468 = dma.done [#allocation10], 1024
    $region49: #{tpu_custom_call.1} parent=1 // pred_fallthru
      _
    %1469 = vsyncpa [#allocation3], 1
    %1470 = vsyncpa [#allocation6], 1
    %1471 = vsyncpa [#allocation4], 1
    %1472 = vsyncpa [#allocation10], 1

// kernel: tpu_custom_call.1
$region0: #{tpu_custom_call.1}
  #allocation0 [shape = 'u32[]', space=smem, size = 0x4, offset = 0x4, fixed_abs, tag = 'smem constant byte address 0x4 - core index']
  #allocation1 [shape = 'u32[144,128]{1,0:T(1,128)}', space=vmem, size = 0x12000, scoped, tag = 'internal scratch']
  %s0 = inlined_call_operand.hbm [shape: f32[16,1024], index: 0, kind: input, shape index: {}]
  %s1 = inlined_call_operand.hbm [shape: bf16[1024,128], index: 1, kind: input, shape index: {}]
  %s2 = inlined_call_operand.vmem [shape: f32[1,128], index: 2, kind: input, shape index: {}]
  %s3 = inlined_call_operand.hbm [shape: bf16[128,1024], index: 3, kind: input, shape index: {}]
  %s4 = inlined_call_operand.vmem [shape: f32[1,1024], index: 4, kind: input, shape index: {}]
  %s5 = inlined_call_operand.hbm [shape: bf16[16,128], index: 5, kind: output, shape index: {0}]
  %s6 = inlined_call_operand.hbm [shape: bf16[16,1024], index: 6, kind: output, shape index: {1}]
  %7 = xla_tuple %s5, %s6
  %s8 = sld [smem:[#allocation0]]
  $region50: #{tpu_custom_call.1} parent=0
    _
  %s10 = ssub.s32 1, %s8
  %s11 = scalar_select 0, %s10, %s8
  $region1: #{tpu_custom_call.1} parent=0
    #allocation2 [shape = 'u8[65536]{0}', space=vmem, size = 0x10000, scoped, tag = 'input window, operand 0, single buffered']
    #allocation3 [shape = 's32[1]{0}', space=sflag, size = 0x4, scoped, tag = 'scoped memory for tpu_custom_call.1']
    #allocation4 [shape = 's32[1]{0}', space=sflag, size = 0x4, scoped, tag = 'scoped memory for tpu_custom_call.1']
    #allocation5 [shape = 'u8[262144]{0}', space=vmem, size = 0x40000, scoped, tag = 'input window, operand 1, single buffered']
    #allocation6 [shape = 's32[1]{0}', space=sflag, size = 0x4, scoped, tag = 'scoped memory for tpu_custom_call.1']
    #allocation7 [shape = 'u8[262144]{0}', space=vmem, size = 0x40000, scoped, tag = 'input window, operand 3, single buffered']
    #allocation8 [shape = 'u8[4096]{0}', space=vmem, size = 0x1000, scoped, tag = 'output window, operand 0, single buffered']
    #allocation9 [shape = 'u8[32768]{0}', space=vmem, size = 0x8000, scoped, tag = 'output window, operand 1, single buffered']
    #allocation10 [shape = 's32[1]{0}', space=sflag, size = 0x4, scoped, tag = 'scoped memory for tpu_custom_call.1']
    %12 = vsyncpa [#allocation3], 0
    %13 = vsyncpa [#allocation6], 0
    %14 = vsyncpa [#allocation4], 0
    %15 = vsyncpa [#allocation10], 0
    // Predicated region
    $region2: #{tpu_custom_call.1} parent=1 // pred_check
      _
    $region3: #{tpu_custom_call.1} parent=1 // pred_check_branch
      %17 = sbr.rel (0) target = $region5
    $region4: #{tpu_custom_call.1} parent=1 // pred_region
      %s19 = ssub.s32 2048, 2048
      %20 = vsyncadd [#allocation3], %s19
      %s21 = sshll.u32 [#allocation2], 4
      %s22 = int_to_ptr.vmem [resolvable:$true] %s21
      %27 = dma.hbm_to_vmem [thread:$0]  %s0, 2048, %s22, [#allocation3], 1024, 1024, 64
    $region5: #{tpu_custom_call.1} parent=1 // pred_fallthru
      _
    // Predicated region
    $region6: #{tpu_custom_call.1} parent=1 // pred_check
      _
    $region7: #{tpu_custom_call.1} parent=1 // pred_check_branch
      %29 = sbr.rel (0) target = $region9
    $region8: #{tpu_custom_call.1} parent=1 // pred_region
      %s31 = ssub.s32 8192, 8192
      %32 = vsyncadd [#allocation6], %s31
      %s33 = sshll.u32 [#allocation5], 4
      %s34 = int_to_ptr.vmem [resolvable:$true] %s33
      %39 = dma.hbm_to_vmem [thread:$0]  %s1, 8192, %s34, [#allocation6], 64, 64, 4
    $region9: #{tpu_custom_call.1} parent=1 // pred_fallthru
      _
    // Predicated region
    $region10: #{tpu_custom_call.1} parent=1 // pred_check
      _
    $region11: #{tpu_custom_call.1} parent=1 // pred_check_branch
      %41 = sbr.rel (0) target = $region13
    $region12: #{tpu_custom_call.1} parent=1 // pred_region
      _
    $region13: #{tpu_custom_call.1} parent=1 // pred_fallthru
      _
    // Predicated region
    $region14: #{tpu_custom_call.1} parent=1 // pred_check
      _
    $region15: #{tpu_custom_call.1} parent=1 // pred_check_branch
      %43 = sbr.rel (0) target = $region17
    $region16: #{tpu_custom_call.1} parent=1 // pred_region
      %s45 = ssub.s32 8192, 8192
      %46 = vsyncadd [#allocation6], %s45
      %s47 = sshll.u32 [#allocation7], 4
      %s48 = int_to_ptr.vmem [resolvable:$true] %s47
      %53 = dma.hbm_to_vmem [thread:$0]  %s3, 8192, %s48, [#allocation6], 512, 512, 32
    $region17: #{tpu_custom_call.1} parent=1 // pred_fallthru
      _
    // Predicated region
    $region18: #{tpu_custom_call.1} parent=1 // pred_check
      _
    $region19: #{tpu_custom_call.1} parent=1 // pred_check_branch
      %55 = sbr.rel (0) target = $region21
    $region20: #{tpu_custom_call.1} parent=1 // pred_region
      _
    $region21: #{tpu_custom_call.1} parent=1 // pred_fallthru
      _
    // Predicated region
    $region22: #{tpu_custom_call.1} parent=1 // pred_check
      _
    $region23: #{tpu_custom_call.1} parent=1 // pred_check_branch
      %57 = sbr.rel (0) target = $region25
    $region24: #{tpu_custom_call.1} parent=1 // pred_region
      %58 = dma.done [#allocation3], 2048
    $region25: #{tpu_custom_call.1} parent=1 // pred_fallthru
      _
    // Predicated region
    $region26: #{tpu_custom_call.1} parent=1 // pred_check
      _
    $region27: #{tpu_custom_call.1} parent=1 // pred_check_branch
      %60 = sbr.rel (0) target = $region29
    $region28: #{tpu_custom_call.1} parent=1 // pred_region
      %61 = dma.done [#allocation6], 8192
    $region29: #{tpu_custom_call.1} parent=1 // pred_fallthru
      _
    // Predicated region
    $region30: #{tpu_custom_call.1} parent=1 // pred_check
      _
    $region31: #{tpu_custom_call.1} parent=1 // pred_check_branch
      %63 = sbr.rel (0) target = $region33
    $region32: #{tpu_custom_call.1} parent=1 // pred_region
      %64 = dma.done [#allocation6], 8192
    $region33: #{tpu_custom_call.1} parent=1 // pred_fallthru
      _
    %v66 = vld [vmem:[#allocation2] sm:$0xff]
    %v67 = vld [vmem:[#allocation2 + $0x8] sm:$0xff]
    %v68 = vld [vmem:[#allocation2 + $0x10] sm:$0xff]
    %v69 = vld [vmem:[#allocation2 + $0x18] sm:$0xff]
    %v70 = vld [vmem:[#allocation2 + $0x20] sm:$0xff]
    %v71 = vld [vmem:[#allocation2 + $0x28] sm:$0xff]
    %v72 = vld [vmem:[#allocation2 + $0x30] sm:$0xff]
    %v73 = vld [vmem:[#allocation2 + $0x38] sm:$0xff]
    %v74 = vld [vmem:[#allocation2 + $0x40] sm:$0xff]
    %v75 = vld [vmem:[#allocation2 + $0x48] sm:$0xff]
    %v76 = vld [vmem:[#allocation2 + $0x50] sm:$0xff]
    %v77 = vld [vmem:[#allocation2 + $0x58] sm:$0xff]
    %v78 = vld [vmem:[#allocation2 + $0x60] sm:$0xff]
    %v79 = vld [vmem:[#allocation2 + $0x68] sm:$0xff]
    %v80 = vld [vmem:[#allocation2 + $0x70] sm:$0xff]
    %v81 = vld [vmem:[#allocation2 + $0x78] sm:$0xff]
    %v82 = vpack.c.bf16 %v74, %v66
    %v83 = vpack.c.bf16 %v75, %v67
    %v84 = vpack.c.bf16 %v76, %v68
    %v85 = vpack.c.bf16 %v77, %v69
    %v86 = vpack.c.bf16 %v78, %v70
    %v87 = vpack.c.bf16 %v79, %v71
    %v88 = vpack.c.bf16 %v80, %v72
    %v89 = vpack.c.bf16 %v81, %v73
    %v90 = vld [vmem:[#allocation5] sm:$0xf]
    %v91 = vld [vmem:[#allocation5 + $0x4] sm:$0xf]
    %v92 = vld [vmem:[#allocation5 + $0x8] sm:$0xf]
    %v93 = vld [vmem:[#allocation5 + $0xc] sm:$0xf]
    %v94 = vld [vmem:[#allocation5 + $0x10] sm:$0xf]
    %v95 = vld [vmem:[#allocation5 + $0x14] sm:$0xf]
    %v96 = vld [vmem:[#allocation5 + $0x18] sm:$0xf]
    %v97 = vld [vmem:[#allocation5 + $0x1c] sm:$0xf]
    %v98 = vld [vmem:[#allocation5 + $0x20] sm:$0xf]
    %v99 = vld [vmem:[#allocation5 + $0x24] sm:$0xf]
    %v100 = vld [vmem:[#allocation5 + $0x28] sm:$0xf]
    %v101 = vld [vmem:[#allocation5 + $0x2c] sm:$0xf]
    %v102 = vld [vmem:[#allocation5 + $0x30] sm:$0xf]
    %v103 = vld [vmem:[#allocation5 + $0x34] sm:$0xf]
    %v104 = vld [vmem:[#allocation5 + $0x38] sm:$0xf]
    %v105 = vld [vmem:[#allocation5 + $0x3c] sm:$0xf]
    %v106 = vld [vmem:[#allocation5 + $0x40] sm:$0xf]
    %v107 = vld [vmem:[#allocation5 + $0x44] sm:$0xf]
    %v108 = vld [vmem:[#allocation5 + $0x48] sm:$0xf]
    %v109 = vld [vmem:[#allocation5 + $0x4c] sm:$0xf]
    %v110 = vld [vmem:[#allocation5 + $0x50] sm:$0xf]
    %v111 = vld [vmem:[#allocation5 + $0x54] sm:$0xf]
    %v112 = vld [vmem:[#allocation5 + $0x58] sm:$0xf]
    %v113 = vld [vmem:[#allocation5 + $0x5c] sm:$0xf]
    %v114 = vld [vmem:[#allocation5 + $0x60] sm:$0xf]
    %v115 = vld [vmem:[#allocation5 + $0x64] sm:$0xf]
    %v116 = vld [vmem:[#allocation5 + $0x68] sm:$0xf]
    %v117 = vld [vmem:[#allocation5 + $0x6c] sm:$0xf]
    %v118 = vld [vmem:[#allocation5 + $0x70] sm:$0xf]
    %v119 = vld [vmem:[#allocation5 + $0x74] sm:$0xf]
    %v120 = vld [vmem:[#allocation5 + $0x78] sm:$0xf]
    %v121 = vld [vmem:[#allocation5 + $0x7c] sm:$0xf]
    %v122 = vld [vmem:[#allocation5 + $0x80] sm:$0xf]
    %v123 = vld [vmem:[#allocation5 + $0x84] sm:$0xf]
    %v124 = vld [vmem:[#allocation5 + $0x88] sm:$0xf]
    %v125 = vld [vmem:[#allocation5 + $0x8c] sm:$0xf]
    %v126 = vld [vmem:[#allocation5 + $0x90] sm:$0xf]
    %v127 = vld [vmem:[#allocation5 + $0x94] sm:$0xf]
    %v128 = vld [vmem:[#allocation5 + $0x98] sm:$0xf]
    %v129 = vld [vmem:[#allocation5 + $0x9c] sm:$0xf]
    %v130 = vld [vmem:[#allocation5 + $0xa0] sm:$0xf]
    %v131 = vld [vmem:[#allocation5 + $0xa4] sm:$0xf]
    %v132 = vld [vmem:[#allocation5 + $0xa8] sm:$0xf]
    %v133 = vld [vmem:[#allocation5 + $0xac] sm:$0xf]
    %v134 = vld [vmem:[#allocation5 + $0xb0] sm:$0xf]
    %v135 = vld [vmem:[#allocation5 + $0xb4] sm:$0xf]
    %v136 = vld [vmem:[#allocation5 + $0xb8] sm:$0xf]
    %v137 = vld [vmem:[#allocation5 + $0xbc] sm:$0xf]
    %v138 = vld [vmem:[#allocation5 + $0xc0] sm:$0xf]
    %v139 = vld [vmem:[#allocation5 + $0xc4] sm:$0xf]
    %v140 = vld [vmem:[#allocation5 + $0xc8] sm:$0xf]
    %v141 = vld [vmem:[#allocation5 + $0xcc] sm:$0xf]
    %v142 = vld [vmem:[#allocation5 + $0xd0] sm:$0xf]
    %v143 = vld [vmem:[#allocation5 + $0xd4] sm:$0xf]
    %v144 = vld [vmem:[#allocation5 + $0xd8] sm:$0xf]
    %v145 = vld [vmem:[#allocation5 + $0xdc] sm:$0xf]
    %v146 = vld [vmem:[#allocation5 + $0xe0] sm:$0xf]
    %v147 = vld [vmem:[#allocation5 + $0xe4] sm:$0xf]
    %v148 = vld [vmem:[#allocation5 + $0xe8] sm:$0xf]
    %v149 = vld [vmem:[#allocation5 + $0xec] sm:$0xf]
    %v150 = vld [vmem:[#allocation5 + $0xf0] sm:$0xf]
    %v151 = vld [vmem:[#allocation5 + $0xf4] sm:$0xf]
    %v152 = vld [vmem:[#allocation5 + $0xf8] sm:$0xf]
    %v153 = vld [vmem:[#allocation5 + $0xfc] sm:$0xf]
    %v154 = vld [vmem:[#allocation5 + $0x100] sm:$0xf]
    %v155 = vld [vmem:[#allocation5 + $0x104] sm:$0xf]
    %v156 = vld [vmem:[#allocation5 + $0x108] sm:$0xf]
    %v157 = vld [vmem:[#allocation5 + $0x10c] sm:$0xf]
    %v158 = vld [vmem:[#allocation5 + $0x110] sm:$0xf]
    %v159 = vld [vmem:[#allocation5 + $0x114] sm:$0xf]
    %v160 = vld [vmem:[#allocation5 + $0x118] sm:$0xf]
    %v161 = vld [vmem:[#allocation5 + $0x11c] sm:$0xf]
    %v162 = vld [vmem:[#allocation5 + $0x120] sm:$0xf]
    %v163 = vld [vmem:[#allocation5 + $0x124] sm:$0xf]
    %v164 = vld [vmem:[#allocation5 + $0x128] sm:$0xf]
    %v165 = vld [vmem:[#allocation5 + $0x12c] sm:$0xf]
    %v166 = vld [vmem:[#allocation5 + $0x130] sm:$0xf]
    %v167 = vld [vmem:[#allocation5 + $0x134] sm:$0xf]
    %v168 = vld [vmem:[#allocation5 + $0x138] sm:$0xf]
    %v169 = vld [vmem:[#allocation5 + $0x13c] sm:$0xf]
    %v170 = vld [vmem:[#allocation5 + $0x140] sm:$0xf]
    %v171 = vld [vmem:[#allocation5 + $0x144] sm:$0xf]
    %v172 = vld [vmem:[#allocation5 + $0x148] sm:$0xf]
    %v173 = vld [vmem:[#allocation5 + $0x14c] sm:$0xf]
    %v174 = vld [vmem:[#allocation5 + $0x150] sm:$0xf]
    %v175 = vld [vmem:[#allocation5 + $0x154] sm:$0xf]
    %v176 = vld [vmem:[#allocation5 + $0x158] sm:$0xf]
    %v177 = vld [vmem:[#allocation5 + $0x15c] sm:$0xf]
    %v178 = vld [vmem:[#allocation5 + $0x160] sm:$0xf]
    %v179 = vld [vmem:[#allocation5 + $0x164] sm:$0xf]
    %v180 = vld [vmem:[#allocation5 + $0x168] sm:$0xf]
    %v181 = vld [vmem:[#allocation5 + $0x16c] sm:$0xf]
    %v182 = vld [vmem:[#allocation5 + $0x170] sm:$0xf]
    %v183 = vld [vmem:[#allocation5 + $0x174] sm:$0xf]
    %v184 = vld [vmem:[#allocation5 + $0x178] sm:$0xf]
    %v185 = vld [vmem:[#allocation5 + $0x17c] sm:$0xf]
    %v186 = vld [vmem:[#allocation5 + $0x180] sm:$0xf]
    %v187 = vld [vmem:[#allocation5 + $0x184] sm:$0xf]
    %v188 = vld [vmem:[#allocation5 + $0x188] sm:$0xf]
    %v189 = vld [vmem:[#allocation5 + $0x18c] sm:$0xf]
    %v190 = vld [vmem:[#allocation5 + $0x190] sm:$0xf]
    %v191 = vld [vmem:[#allocation5 + $0x194] sm:$0xf]
    %v192 = vld [vmem:[#allocation5 + $0x198] sm:$0xf]
    %v193 = vld [vmem:[#allocation5 + $0x19c] sm:$0xf]
    %v194 = vld [vmem:[#allocation5 + $0x1a0] sm:$0xf]
    %v195 = vld [vmem:[#allocation5 + $0x1a4] sm:$0xf]
    %v196 = vld [vmem:[#allocation5 + $0x1a8] sm:$0xf]
    %v197 = vld [vmem:[#allocation5 + $0x1ac] sm:$0xf]
    %v198 = vld [vmem:[#allocation5 + $0x1b0] sm:$0xf]
    %v199 = vld [vmem:[#allocation5 + $0x1b4] sm:$0xf]
    %v200 = vld [vmem:[#allocation5 + $0x1b8] sm:$0xf]
    %v201 = vld [vmem:[#allocation5 + $0x1bc] sm:$0xf]
    %v202 = vld [vmem:[#allocation5 + $0x1c0] sm:$0xf]
    %v203 = vld [vmem:[#allocation5 + $0x1c4] sm:$0xf]
    %v204 = vld [vmem:[#allocation5 + $0x1c8] sm:$0xf]
    %v205 = vld [vmem:[#allocation5 + $0x1cc] sm:$0xf]
    %v206 = vld [vmem:[#allocation5 + $0x1d0] sm:$0xf]
    %v207 = vld [vmem:[#allocation5 + $0x1d4] sm:$0xf]
    %v208 = vld [vmem:[#allocation5 + $0x1d8] sm:$0xf]
    %v209 = vld [vmem:[#allocation5 + $0x1dc] sm:$0xf]
    %v210 = vld [vmem:[#allocation5 + $0x1e0] sm:$0xf]
    %v211 = vld [vmem:[#allocation5 + $0x1e4] sm:$0xf]
    %v212 = vld [vmem:[#allocation5 + $0x1e8] sm:$0xf]
    %v213 = vld [vmem:[#allocation5 + $0x1ec] sm:$0xf]
    %v214 = vld [vmem:[#allocation5 + $0x1f0] sm:$0xf]
    %v215 = vld [vmem:[#allocation5 + $0x1f4] sm:$0xf]
    %v216 = vld [vmem:[#allocation5 + $0x1f8] sm:$0xf]
    %v217 = vld [vmem:[#allocation5 + $0x1fc] sm:$0xf]
    %v218 = vld [vmem:[%s2] sm:$0x1]
    %v220 = vlaneseq
    %v221 = vshrl.u32 %v220, 7
    %v222 = vsub.s32 0, %v221
    %v223 = vrot.slane %v218, %v222
    %v353 = vunpack.c.l.b16 %v90
    %v354 = vunpack.c.l.b16 %v91
    %v355 = vunpack.c.l.b16 %v92
    %v356 = vunpack.c.l.b16 %v93
    %v357 = vunpack.c.l.b16 %v94
    %v358 = vunpack.c.l.b16 %v95
    %v359 = vunpack.c.l.b16 %v96
    %v360 = vunpack.c.l.b16 %v97
    %v361 = vunpack.c.l.b16 %v98
    %v362 = vunpack.c.l.b16 %v99
    %v363 = vunpack.c.l.b16 %v100
    %v364 = vunpack.c.l.b16 %v101
    %v365 = vunpack.c.l.b16 %v102
    %v366 = vunpack.c.l.b16 %v103
    %v367 = vunpack.c.l.b16 %v104
    %v368 = vunpack.c.l.b16 %v105
    %v369 = vunpack.c.l.b16 %v106
    %v370 = vunpack.c.l.b16 %v107
    %v371 = vunpack.c.l.b16 %v108
    %v372 = vunpack.c.l.b16 %v109
    %v373 = vunpack.c.l.b16 %v110
    %v374 = vunpack.c.l.b16 %v111
    %v375 = vunpack.c.l.b16 %v112
    %v376 = vunpack.c.l.b16 %v113
    %v377 = vunpack.c.l.b16 %v114
    %v378 = vunpack.c.l.b16 %v115
    %v379 = vunpack.c.l.b16 %v116
    %v380 = vunpack.c.l.b16 %v117
    %v381 = vunpack.c.l.b16 %v118
    %v382 = vunpack.c.l.b16 %v119
    %v383 = vunpack.c.l.b16 %v120
    %v384 = vunpack.c.l.b16 %v121
    %v385 = vunpack.c.l.b16 %v122
    %v386 = vunpack.c.l.b16 %v123
    %v387 = vunpack.c.l.b16 %v124
    %v388 = vunpack.c.l.b16 %v125
    %v389 = vunpack.c.l.b16 %v126
    %v390 = vunpack.c.l.b16 %v127
    %v391 = vunpack.c.l.b16 %v128
    %v392 = vunpack.c.l.b16 %v129
    %v393 = vunpack.c.l.b16 %v130
    %v394 = vunpack.c.l.b16 %v131
    %v395 = vunpack.c.l.b16 %v132
    %v396 = vunpack.c.l.b16 %v133
    %v397 = vunpack.c.l.b16 %v134
    %v398 = vunpack.c.l.b16 %v135
    %v399 = vunpack.c.l.b16 %v136
    %v400 = vunpack.c.l.b16 %v137
    %v401 = vunpack.c.l.b16 %v138
    %v402 = vunpack.c.l.b16 %v139
    %v403 = vunpack.c.l.b16 %v140
    %v404 = vunpack.c.l.b16 %v141
    %v405 = vunpack.c.l.b16 %v142
    %v406 = vunpack.c.l.b16 %v143
    %v407 = vunpack.c.l.b16 %v144
    %v408 = vunpack.c.l.b16 %v145
    %v409 = vunpack.c.l.b16 %v146
    %v410 = vunpack.c.l.b16 %v147
    %v411 = vunpack.c.l.b16 %v148
    %v412 = vunpack.c.l.b16 %v149
    %v413 = vunpack.c.l.b16 %v150
    %v414 = vunpack.c.l.b16 %v151
    %v415 = vunpack.c.l.b16 %v152
    %v416 = vunpack.c.l.b16 %v153
    %v417 = vunpack.c.l.b16 %v154
    %v418 = vunpack.c.l.b16 %v155
    %v419 = vunpack.c.l.b16 %v156
    %v420 = vunpack.c.l.b16 %v157
    %v421 = vunpack.c.l.b16 %v158
    %v422 = vunpack.c.l.b16 %v159
    %v423 = vunpack.c.l.b16 %v160
    %v424 = vunpack.c.l.b16 %v161
    %v425 = vunpack.c.l.b16 %v162
    %v426 = vunpack.c.l.b16 %v163
    %v427 = vunpack.c.l.b16 %v164
    %v428 = vunpack.c.l.b16 %v165
    %v429 = vunpack.c.l.b16 %v166
    %v430 = vunpack.c.l.b16 %v167
    %v431 = vunpack.c.l.b16 %v168
    %v432 = vunpack.c.l.b16 %v169
    %v433 = vunpack.c.l.b16 %v170
    %v434 = vunpack.c.l.b16 %v171
    %v435 = vunpack.c.l.b16 %v172
    %v436 = vunpack.c.l.b16 %v173
    %v437 = vunpack.c.l.b16 %v174
    %v438 = vunpack.c.l.b16 %v175
    %v439 = vunpack.c.l.b16 %v176
    %v440 = vunpack.c.l.b16 %v177
    %v441 = vunpack.c.l.b16 %v178
    %v442 = vunpack.c.l.b16 %v179
    %v443 = vunpack.c.l.b16 %v180
    %v444 = vunpack.c.l.b16 %v181
    %v445 = vunpack.c.l.b16 %v182
    %v446 = vunpack.c.l.b16 %v183
    %v447 = vunpack.c.l.b16 %v184
    %v448 = vunpack.c.l.b16 %v185
    %v449 = vunpack.c.l.b16 %v186
    %v450 = vunpack.c.l.b16 %v187
    %v451 = vunpack.c.l.b16 %v188
    %v452 = vunpack.c.l.b16 %v189
    %v453 = vunpack.c.l.b16 %v190
    %v454 = vunpack.c.l.b16 %v191
    %v455 = vunpack.c.l.b16 %v192
    %v456 = vunpack.c.l.b16 %v193
    %v457 = vunpack.c.l.b16 %v194
    %v458 = vunpack.c.l.b16 %v195
    %v459 = vunpack.c.l.b16 %v196
    %v460 = vunpack.c.l.b16 %v197
    %v461 = vunpack.c.l.b16 %v198
    %v462 = vunpack.c.l.b16 %v199
    %v463 = vunpack.c.l.b16 %v200
    %v464 = vunpack.c.l.b16 %v201
    %v465 = vunpack.c.l.b16 %v202
    %v466 = vunpack.c.l.b16 %v203
    %v467 = vunpack.c.l.b16 %v204
    %v468 = vunpack.c.l.b16 %v205
    %v469 = vunpack.c.l.b16 %v206
    %v470 = vunpack.c.l.b16 %v207
    %v471 = vunpack.c.l.b16 %v208
    %v472 = vunpack.c.l.b16 %v209
    %v473 = vunpack.c.l.b16 %v210
    %v474 = vunpack.c.l.b16 %v211
    %v475 = vunpack.c.l.b16 %v212
    %v476 = vunpack.c.l.b16 %v213
    %v477 = vunpack.c.l.b16 %v214
    %v478 = vunpack.c.l.b16 %v215
    %v479 = vunpack.c.l.b16 %v216
    %v480 = vunpack.c.l.b16 %v217
    %v481 = vpack.c.b16 %v354, %v353
    %v482 = vpack.c.b16 %v356, %v355
    %v483 = vpack.c.b16 %v358, %v357
    %v484 = vpack.c.b16 %v360, %v359
    %v485 = vpack.c.b16 %v362, %v361
    %v486 = vpack.c.b16 %v364, %v363
    %v487 = vpack.c.b16 %v366, %v365
    %v488 = vpack.c.b16 %v368, %v367
    %v489 = vpack.c.b16 %v370, %v369
    %v490 = vpack.c.b16 %v372, %v371
    %v491 = vpack.c.b16 %v374, %v373
    %v492 = vpack.c.b16 %v376, %v375
    %v493 = vpack.c.b16 %v378, %v377
    %v494 = vpack.c.b16 %v380, %v379
    %v495 = vpack.c.b16 %v382, %v381
    %v496 = vpack.c.b16 %v384, %v383
    %v497 = vpack.c.b16 %v386, %v385
    %v498 = vpack.c.b16 %v388, %v387
    %v499 = vpack.c.b16 %v390, %v389
    %v500 = vpack.c.b16 %v392, %v391
    %v501 = vpack.c.b16 %v394, %v393
    %v502 = vpack.c.b16 %v396, %v395
    %v503 = vpack.c.b16 %v398, %v397
    %v504 = vpack.c.b16 %v400, %v399
    %v505 = vpack.c.b16 %v402, %v401
    %v506 = vpack.c.b16 %v404, %v403
    %v507 = vpack.c.b16 %v406, %v405
    %v508 = vpack.c.b16 %v408, %v407
    %v509 = vpack.c.b16 %v410, %v409
    %v510 = vpack.c.b16 %v412, %v411
    %v511 = vpack.c.b16 %v414, %v413
    %v512 = vpack.c.b16 %v416, %v415
    %v513 = vpack.c.b16 %v418, %v417
    %v514 = vpack.c.b16 %v420, %v419
    %v515 = vpack.c.b16 %v422, %v421
    %v516 = vpack.c.b16 %v424, %v423
    %v517 = vpack.c.b16 %v426, %v425
    %v518 = vpack.c.b16 %v428, %v427
    %v519 = vpack.c.b16 %v430, %v429
    %v520 = vpack.c.b16 %v432, %v431
    %v521 = vpack.c.b16 %v434, %v433
    %v522 = vpack.c.b16 %v436, %v435
    %v523 = vpack.c.b16 %v438, %v437
    %v524 = vpack.c.b16 %v440, %v439
    %v525 = vpack.c.b16 %v442, %v441
    %v526 = vpack.c.b16 %v444, %v443
    %v527 = vpack.c.b16 %v446, %v445
    %v528 = vpack.c.b16 %v448, %v447
    %v529 = vpack.c.b16 %v450, %v449
    %v530 = vpack.c.b16 %v452, %v451
    %v531 = vpack.c.b16 %v454, %v453
    %v532 = vpack.c.b16 %v456, %v455
    %v533 = vpack.c.b16 %v458, %v457
    %v534 = vpack.c.b16 %v460, %v459
    %v535 = vpack.c.b16 %v462, %v461
    %v536 = vpack.c.b16 %v464, %v463
    %v537 = vpack.c.b16 %v466, %v465
    %v538 = vpack.c.b16 %v468, %v467
    %v539 = vpack.c.b16 %v470, %v469
    %v540 = vpack.c.b16 %v472, %v471
    %v541 = vpack.c.b16 %v474, %v473
    %v542 = vpack.c.b16 %v476, %v475
    %v543 = vpack.c.b16 %v478, %v477
    %v544 = vpack.c.b16 %v480, %v479
    %609 = vmatprep.subr.bf16.mxu0 0
    %610 = vmatpush1.bf16.msra.mxu0 %v481
    %611 = vmatprep.subr.bf16.mxu0 0
    %612 = vmatpush1.bf16.msra.mxu0 %v482
    %613 = vmatprep.subr.bf16.mxu0 0
    %614 = vmatpush1.bf16.msra.mxu0 %v483
    %615 = vmatprep.subr.bf16.mxu0 0
    %616 = vmatpush1.bf16.msra.mxu0 %v484
    %617 = vmatprep.subr.bf16.mxu0 0
    %618 = vmatpush1.bf16.msra.mxu0 %v485
    %619 = vmatprep.subr.bf16.mxu0 0
    %620 = vmatpush1.bf16.msra.mxu0 %v486
    %621 = vmatprep.subr.bf16.mxu0 0
    %622 = vmatpush1.bf16.msra.mxu0 %v487
    %623 = vmatprep.subr.bf16.mxu0 0
    %624 = vmatpush1.bf16.msra.mxu0 %v488
    %625 = vmatprep.subr.bf16.mxu0 0
    %626 = vmatpush1.bf16.msra.mxu0 %v489
    %627 = vmatprep.subr.bf16.mxu0 0
    %628 = vmatpush1.bf16.msra.mxu0 %v490
    %629 = vmatprep.subr.bf16.mxu0 0
    %630 = vmatpush1.bf16.msra.mxu0 %v491
    %631 = vmatprep.subr.bf16.mxu0 0
    %632 = vmatpush1.bf16.msra.mxu0 %v492
    %633 = vmatprep.subr.bf16.mxu0 0
    %634 = vmatpush1.bf16.msra.mxu0 %v493
    %635 = vmatprep.subr.bf16.mxu0 0
    %636 = vmatpush1.bf16.msra.mxu0 %v494
    %637 = vmatprep.subr.bf16.mxu0 0
    %638 = vmatpush1.bf16.msra.mxu0 %v495
    %639 = vmatprep.subr.bf16.mxu0 0
    %640 = vmatpush1.bf16.msra.mxu0 %v496
    %641 = vmatprep.mubr.bf16.mxu0 %v83
    %642 = vmatmul.mubr.bf16.gmra.mrb[0].mxu0 %v82
    %v643 = vpop.f32.mrb[0].mxu0
    %v644 = vadd.f32 %v223, %v643
    %v645 = vpop.f32.mrb[0].mxu0
    %v646 = vpop.f32.mrb[0].mxu0
    %v647 = vadd.f32 %v223, %v646
    %v648 = vpop.f32.mrb[0].mxu0
    %649 = vdwg.mxu0
    %650 = vmatprep.subr.bf16.mxu0 0
    %651 = vmatpush1.bf16.msra.mxu0 %v497
    %652 = vmatprep.subr.bf16.mxu0 0
    %653 = vmatpush1.bf16.msra.mxu0 %v498
    %654 = vmatprep.subr.bf16.mxu0 0
    %655 = vmatpush1.bf16.msra.mxu0 %v499
    %656 = vmatprep.subr.bf16.mxu0 0
    %657 = vmatpush1.bf16.msra.mxu0 %v500
    %658 = vmatprep.subr.bf16.mxu0 0
    %659 = vmatpush1.bf16.msra.mxu0 %v501
    %660 = vmatprep.subr.bf16.mxu0 0
    %661 = vmatpush1.bf16.msra.mxu0 %v502
    %662 = vmatprep.subr.bf16.mxu0 0
    %663 = vmatpush1.bf16.msra.mxu0 %v503
    %664 = vmatprep.subr.bf16.mxu0 0
    %665 = vmatpush1.bf16.msra.mxu0 %v504
    %666 = vmatprep.subr.bf16.mxu0 0
    %667 = vmatpush1.bf16.msra.mxu0 %v505
    %668 = vmatprep.subr.bf16.mxu0 0
    %669 = vmatpush1.bf16.msra.mxu0 %v506
    %670 = vmatprep.subr.bf16.mxu0 0
    %671 = vmatpush1.bf16.msra.mxu0 %v507
    %672 = vmatprep.subr.bf16.mxu0 0
    %673 = vmatpush1.bf16.msra.mxu0 %v508
    %674 = vmatprep.subr.bf16.mxu0 0
    %675 = vmatpush1.bf16.msra.mxu0 %v509
    %676 = vmatprep.subr.bf16.mxu0 0
    %677 = vmatpush1.bf16.msra.mxu0 %v510
    %678 = vmatprep.subr.bf16.mxu0 0
    %679 = vmatpush1.bf16.msra.mxu0 %v511
    %680 = vmatprep.subr.bf16.mxu0 0
    %681 = vmatpush1.bf16.msra.mxu0 %v512
    %682 = vmatprep.mubr.bf16.mxu0 %v85
    %683 = vmatmul.mubr.bf16.gmra.mrb[0].mxu0 %v84
    %v684 = vpop.f32.mrb[0].mxu0
    %v685 = vadd.f32 %v644, %v684
    %v686 = vpop.f32.mrb[0].mxu0
    %v687 = vpop.f32.mrb[0].mxu0
    %v688 = vadd.f32 %v647, %v687
    %v689 = vpop.f32.mrb[0].mxu0
    %690 = vdwg.mxu0
    %691 = vmatprep.subr.bf16.mxu0 0
    %692 = vmatpush1.bf16.msra.mxu0 %v513
    %693 = vmatprep.subr.bf16.mxu0 0
    %694 = vmatpush1.bf16.msra.mxu0 %v514
    %695 = vmatprep.subr.bf16.mxu0 0
    %696 = vmatpush1.bf16.msra.mxu0 %v515
    %697 = vmatprep.subr.bf16.mxu0 0
    %698 = vmatpush1.bf16.msra.mxu0 %v516
    %699 = vmatprep.subr.bf16.mxu0 0
    %700 = vmatpush1.bf16.msra.mxu0 %v517
    %701 = vmatprep.subr.bf16.mxu0 0
    %702 = vmatpush1.bf16.msra.mxu0 %v518
    %703 = vmatprep.subr.bf16.mxu0 0
    %704 = vmatpush1.bf16.msra.mxu0 %v519
    %705 = vmatprep.subr.bf16.mxu0 0
    %706 = vmatpush1.bf16.msra.mxu0 %v520
    %707 = vmatprep.subr.bf16.mxu0 0
    %708 = vmatpush1.bf16.msra.mxu0 %v521
    %709 = vmatprep.subr.bf16.mxu0 0
    %710 = vmatpush1.bf16.msra.mxu0 %v522
    %711 = vmatprep.subr.bf16.mxu0 0
    %712 = vmatpush1.bf16.msra.mxu0 %v523
    %713 = vmatprep.subr.bf16.mxu0 0
    %714 = vmatpush1.bf16.msra.mxu0 %v524
    %715 = vmatprep.subr.bf16.mxu0 0
    %716 = vmatpush1.bf16.msra.mxu0 %v525
    %717 = vmatprep.subr.bf16.mxu0 0
    %718 = vmatpush1.bf16.msra.mxu0 %v526
    %719 = vmatprep.subr.bf16.mxu0 0
    %720 = vmatpush1.bf16.msra.mxu0 %v527
    %721 = vmatprep.subr.bf16.mxu0 0
    %722 = vmatpush1.bf16.msra.mxu0 %v528
    %723 = vmatprep.mubr.bf16.mxu0 %v87
    %724 = vmatmul.mubr.bf16.gmra.mrb[0].mxu0 %v86
    %v725 = vpop.f32.mrb[0].mxu0
    %v726 = vadd.f32 %v685, %v725
    %v727 = vpop.f32.mrb[0].mxu0
    %v728 = vpop.f32.mrb[0].mxu0
    %v729 = vadd.f32 %v688, %v728
    %v730 = vpop.f32.mrb[0].mxu0
    %731 = vdwg.mxu0
    %732 = vmatprep.subr.bf16.mxu0 0
    %733 = vmatpush1.bf16.msra.mxu0 %v529
    %734 = vmatprep.subr.bf16.mxu0 0
    %735 = vmatpush1.bf16.msra.mxu0 %v530
    %736 = vmatprep.subr.bf16.mxu0 0
    %737 = vmatpush1.bf16.msra.mxu0 %v531
    %738 = vmatprep.subr.bf16.mxu0 0
    %739 = vmatpush1.bf16.msra.mxu0 %v532
    %740 = vmatprep.subr.bf16.mxu0 0
    %741 = vmatpush1.bf16.msra.mxu0 %v533
    %742 = vmatprep.subr.bf16.mxu0 0
    %743 = vmatpush1.bf16.msra.mxu0 %v534
    %744 = vmatprep.subr.bf16.mxu0 0
    %745 = vmatpush1.bf16.msra.mxu0 %v535
    %746 = vmatprep.subr.bf16.mxu0 0
    %747 = vmatpush1.bf16.msra.mxu0 %v536
    %748 = vmatprep.subr.bf16.mxu0 0
    %749 = vmatpush1.bf16.msra.mxu0 %v537
    %750 = vmatprep.subr.bf16.mxu0 0
    %751 = vmatpush1.bf16.msra.mxu0 %v538
    %752 = vmatprep.subr.bf16.mxu0 0
    %753 = vmatpush1.bf16.msra.mxu0 %v539
    %754 = vmatprep.subr.bf16.mxu0 0
    %755 = vmatpush1.bf16.msra.mxu0 %v540
    %756 = vmatprep.subr.bf16.mxu0 0
    %757 = vmatpush1.bf16.msra.mxu0 %v541
    %758 = vmatprep.subr.bf16.mxu0 0
    %759 = vmatpush1.bf16.msra.mxu0 %v542
    %760 = vmatprep.subr.bf16.mxu0 0
    %761 = vmatpush1.bf16.msra.mxu0 %v543
    %762 = vmatprep.subr.bf16.mxu0 0
    %763 = vmatpush1.bf16.msra.mxu0 %v544
    %764 = vmatprep.mubr.bf16.mxu0 %v89
    %765 = vmatmul.mubr.bf16.gmra.mrb[0].mxu0 %v88
    %v766 = vpop.f32.mrb[0].mxu0
    %v767 = vadd.f32 %v726, %v766
    %v768 = vpop.f32.mrb[0].mxu0
    %v769 = vpop.f32.mrb[0].mxu0
    %v770 = vadd.f32 %v729, %v769
    %v771 = vpop.f32.mrb[0].mxu0
    %772 = vdwg.mxu0
    %v773 = vmax.f32 %v767, 0.0
    %v774 = vmax.f32 %v770, 0.0
    %v775 = vpack.c.bf16 %v774, %v773
    %v777 = vunpack.c.l.b16 %v775
    %v778 = vunpack.c.h.b16 %v775
    %v779 = vpack.c.b16 %v777, %v777
    %v780 = vpack.c.b16 %v778, %v778
    %783 = vst [vmem:[#allocation8] sm:$0xf] %v779
    %784 = vst [vmem:[#allocation8 + $0x4] sm:$0xf] %v780
    %v785 = vld [vmem:[#allocation7] sm:$0xff]
    %v786 = vld [vmem:[#allocation7 + $0x8] sm:$0xff]
    %v787 = vld [vmem:[#allocation7 + $0x10] sm:$0xff]
    %v788 = vld [vmem:[#allocation7 + $0x18] sm:$0xff]
    %v789 = vld [vmem:[#allocation7 + $0x20] sm:$0xff]
    %v790 = vld [vmem:[#allocation7 + $0x28] sm:$0xff]
    %v791 = vld [vmem:[#allocation7 + $0x30] sm:$0xff]
    %v792 = vld [vmem:[#allocation7 + $0x38] sm:$0xff]
    %v793 = vld [vmem:[#allocation7 + $0x40] sm:$0xff]
    %v794 = vld [vmem:[#allocation7 + $0x48] sm:$0xff]
    %v795 = vld [vmem:[#allocation7 + $0x50] sm:$0xff]
    %v796 = vld [vmem:[#allocation7 + $0x58] sm:$0xff]
    %v797 = vld [vmem:[#allocation7 + $0x60] sm:$0xff]
    %v798 = vld [vmem:[#allocation7 + $0x68] sm:$0xff]
    %v799 = vld [vmem:[#allocation7 + $0x70] sm:$0xff]
    %v800 = vld [vmem:[#allocation7 + $0x78] sm:$0xff]
    %v801 = vld [vmem:[#allocation7 + $0x80] sm:$0xff]
    %v802 = vld [vmem:[#allocation7 + $0x88] sm:$0xff]
    %v803 = vld [vmem:[#allocation7 + $0x90] sm:$0xff]
    %v804 = vld [vmem:[#allocation7 + $0x98] sm:$0xff]
    %v805 = vld [vmem:[#allocation7 + $0xa0] sm:$0xff]
    %v806 = vld [vmem:[#allocation7 + $0xa8] sm:$0xff]
    %v807 = vld [vmem:[#allocation7 + $0xb0] sm:$0xff]
    %v808 = vld [vmem:[#allocation7 + $0xb8] sm:$0xff]
    %v809 = vld [vmem:[#allocation7 + $0xc0] sm:$0xff]
    %v810 = vld [vmem:[#allocation7 + $0xc8] sm:$0xff]
    %v811 = vld [vmem:[#allocation7 + $0xd0] sm:$0xff]
    %v812 = vld [vmem:[#allocation7 + $0xd8] sm:$0xff]
    %v813 = vld [vmem:[#allocation7 + $0xe0] sm:$0xff]
    %v814 = vld [vmem:[#allocation7 + $0xe8] sm:$0xff]
    %v815 = vld [vmem:[#allocation7 + $0xf0] sm:$0xff]
    %v816 = vld [vmem:[#allocation7 + $0xf8] sm:$0xff]
    %v817 = vld [vmem:[#allocation7 + $0x100] sm:$0xff]
    %v818 = vld [vmem:[#allocation7 + $0x108] sm:$0xff]
    %v819 = vld [vmem:[#allocation7 + $0x110] sm:$0xff]
    %v820 = vld [vmem:[#allocation7 + $0x118] sm:$0xff]
    %v821 = vld [vmem:[#allocation7 + $0x120] sm:$0xff]
    %v822 = vld [vmem:[#allocation7 + $0x128] sm:$0xff]
    %v823 = vld [vmem:[#allocation7 + $0x130] sm:$0xff]
    %v824 = vld [vmem:[#allocation7 + $0x138] sm:$0xff]
    %v825 = vld [vmem:[#allocation7 + $0x140] sm:$0xff]
    %v826 = vld [vmem:[#allocation7 + $0x148] sm:$0xff]
    %v827 = vld [vmem:[#allocation7 + $0x150] sm:$0xff]
    %v828 = vld [vmem:[#allocation7 + $0x158] sm:$0xff]
    %v829 = vld [vmem:[#allocation7 + $0x160] sm:$0xff]
    %v830 = vld [vmem:[#allocation7 + $0x168] sm:$0xff]
    %v831 = vld [vmem:[#allocation7 + $0x170] sm:$0xff]
    %v832 = vld [vmem:[#allocation7 + $0x178] sm:$0xff]
    %v833 = vld [vmem:[#allocation7 + $0x180] sm:$0xff]
    %v834 = vld [vmem:[#allocation7 + $0x188] sm:$0xff]
    %v835 = vld [vmem:[#allocation7 + $0x190] sm:$0xff]
    %v836 = vld [vmem:[#allocation7 + $0x198] sm:$0xff]
    %v837 = vld [vmem:[#allocation7 + $0x1a0] sm:$0xff]
    %v838 = vld [vmem:[#allocation7 + $0x1a8] sm:$0xff]
    %v839 = vld [vmem:[#allocation7 + $0x1b0] sm:$0xff]
    %v840 = vld [vmem:[#allocation7 + $0x1b8] sm:$0xff]
    %v841 = vld [vmem:[#allocation7 + $0x1c0] sm:$0xff]
    %v842 = vld [vmem:[#allocation7 + $0x1c8] sm:$0xff]
    %v843 = vld [vmem:[#allocation7 + $0x1d0] sm:$0xff]
    %v844 = vld [vmem:[#allocation7 + $0x1d8] sm:$0xff]
    %v845 = vld [vmem:[#allocation7 + $0x1e0] sm:$0xff]
    %v846 = vld [vmem:[#allocation7 + $0x1e8] sm:$0xff]
    %v847 = vld [vmem:[#allocation7 + $0x1f0] sm:$0xff]
    %v848 = vld [vmem:[#allocation7 + $0x1f8] sm:$0xff]
    %v849 = vld [vmem:[%s4] sm:$0xff]
    %v851 = vlaneseq
    %v852 = vshrl.u32 %v851, 7
    %v853 = vsub.s32 0, %v852
    %v854 = vrot.slane %v849, %v853
    %v855 = vlaneseq
    %v856 = vshrl.u32 %v855, 7
    %v857 = vsub.s32 1, %v856
    %v858 = vrot.slane %v849, %v857
    %v859 = vlaneseq
    %v860 = vshrl.u32 %v859, 7
    %v861 = vsub.s32 2, %v860
    %v862 = vrot.slane %v849, %v861
    %v863 = vlaneseq
    %v864 = vshrl.u32 %v863, 7
    %v865 = vsub.s32 3, %v864
    %v866 = vrot.slane %v849, %v865
    %v867 = vlaneseq
    %v868 = vshrl.u32 %v867, 7
    %v869 = vsub.s32 4, %v868
    %v870 = vrot.slane %v849, %v869
    %v871 = vlaneseq
    %v872 = vshrl.u32 %v871, 7
    %v873 = vsub.s32 5, %v872
    %v874 = vrot.slane %v849, %v873
    %v875 = vlaneseq
    %v876 = vshrl.u32 %v875, 7
    %v877 = vsub.s32 6, %v876
    %v878 = vrot.slane %v849, %v877
    %v879 = vlaneseq
    %v880 = vshrl.u32 %v879, 7
    %v881 = vsub.s32 7, %v880
    %v882 = vrot.slane %v849, %v881
    %v955 = vunpack.c.l.b16 %v785
    %v956 = vunpack.c.h.b16 %v785
    %v957 = vunpack.c.l.b16 %v786
    %v958 = vunpack.c.h.b16 %v786
    %v959 = vunpack.c.l.b16 %v787
    %v960 = vunpack.c.h.b16 %v787
    %v961 = vunpack.c.l.b16 %v788
    %v962 = vunpack.c.h.b16 %v788
    %v963 = vunpack.c.l.b16 %v789
    %v964 = vunpack.c.h.b16 %v789
    %v965 = vunpack.c.l.b16 %v790
    %v966 = vunpack.c.h.b16 %v790
    %v967 = vunpack.c.l.b16 %v791
    %v968 = vunpack.c.h.b16 %v791
    %v969 = vunpack.c.l.b16 %v792
    %v970 = vunpack.c.h.b16 %v792
    %v971 = vunpack.c.l.b16 %v793
    %v972 = vunpack.c.h.b16 %v793
    %v973 = vunpack.c.l.b16 %v794
    %v974 = vunpack.c.h.b16 %v794
    %v975 = vunpack.c.l.b16 %v795
    %v976 = vunpack.c.h.b16 %v795
    %v977 = vunpack.c.l.b16 %v796
    %v978 = vunpack.c.h.b16 %v796
    %v979 = vunpack.c.l.b16 %v797
    %v980 = vunpack.c.h.b16 %v797
    %v981 = vunpack.c.l.b16 %v798
    %v982 = vunpack.c.h.b16 %v798
    %v983 = vunpack.c.l.b16 %v799
    %v984 = vunpack.c.h.b16 %v799
    %v985 = vunpack.c.l.b16 %v800
    %v986 = vunpack.c.h.b16 %v800
    %v987 = vunpack.c.l.b16 %v801
    %v988 = vunpack.c.h.b16 %v801
    %v989 = vunpack.c.l.b16 %v802
    %v990 = vunpack.c.h.b16 %v802
    %v991 = vunpack.c.l.b16 %v803
    %v992 = vunpack.c.h.b16 %v803
    %v993 = vunpack.c.l.b16 %v804
    %v994 = vunpack.c.h.b16 %v804
    %v995 = vunpack.c.l.b16 %v805
    %v996 = vunpack.c.h.b16 %v805
    %v997 = vunpack.c.l.b16 %v806
    %v998 = vunpack.c.h.b16 %v806
    %v999 = vunpack.c.l.b16 %v807
    %v1000 = vunpack.c.h.b16 %v807
    %v1001 = vunpack.c.l.b16 %v808
    %v1002 = vunpack.c.h.b16 %v808
    %v1003 = vunpack.c.l.b16 %v809
    %v1004 = vunpack.c.h.b16 %v809
    %v1005 = vunpack.c.l.b16 %v810
    %v1006 = vunpack.c.h.b16 %v810
    %v1007 = vunpack.c.l.b16 %v811
    %v1008 = vunpack.c.h.b16 %v811
    %v1009 = vunpack.c.l.b16 %v812
    %v1010 = vunpack.c.h.b16 %v812
    %v1011 = vunpack.c.l.b16 %v813
    %v1012 = vunpack.c.h.b16 %v813
    %v1013 = vunpack.c.l.b16 %v814
    %v1014 = vunpack.c.h.b16 %v814
    %v1015 = vunpack.c.l.b16 %v815
    %v1016 = vunpack.c.h.b16 %v815
    %v1017 = vunpack.c.l.b16 %v816
    %v1018 = vunpack.c.h.b16 %v816
    %v1019 = vunpack.c.l.b16 %v817
    %v1020 = vunpack.c.h.b16 %v817
    %v1021 = vunpack.c.l.b16 %v818
    %v1022 = vunpack.c.h.b16 %v818
    %v1023 = vunpack.c.l.b16 %v819
    %v1024 = vunpack.c.h.b16 %v819
    %v1025 = vunpack.c.l.b16 %v820
    %v1026 = vunpack.c.h.b16 %v820
    %v1027 = vunpack.c.l.b16 %v821
    %v1028 = vunpack.c.h.b16 %v821
    %v1029 = vunpack.c.l.b16 %v822
    %v1030 = vunpack.c.h.b16 %v822
    %v1031 = vunpack.c.l.b16 %v823
    %v1032 = vunpack.c.h.b16 %v823
    %v1033 = vunpack.c.l.b16 %v824
    %v1034 = vunpack.c.h.b16 %v824
    %v1035 = vunpack.c.l.b16 %v825
    %v1036 = vunpack.c.h.b16 %v825
    %v1037 = vunpack.c.l.b16 %v826
    %v1038 = vunpack.c.h.b16 %v826
    %v1039 = vunpack.c.l.b16 %v827
    %v1040 = vunpack.c.h.b16 %v827
    %v1041 = vunpack.c.l.b16 %v828
    %v1042 = vunpack.c.h.b16 %v828
    %v1043 = vunpack.c.l.b16 %v829
    %v1044 = vunpack.c.h.b16 %v829
    %v1045 = vunpack.c.l.b16 %v830
    %v1046 = vunpack.c.h.b16 %v830
    %v1047 = vunpack.c.l.b16 %v831
    %v1048 = vunpack.c.h.b16 %v831
    %v1049 = vunpack.c.l.b16 %v832
    %v1050 = vunpack.c.h.b16 %v832
    %v1051 = vunpack.c.l.b16 %v833
    %v1052 = vunpack.c.h.b16 %v833
    %v1053 = vunpack.c.l.b16 %v834
    %v1054 = vunpack.c.h.b16 %v834
    %v1055 = vunpack.c.l.b16 %v835
    %v1056 = vunpack.c.h.b16 %v835
    %v1057 = vunpack.c.l.b16 %v836
    %v1058 = vunpack.c.h.b16 %v836
    %v1059 = vunpack.c.l.b16 %v837
    %v1060 = vunpack.c.h.b16 %v837
    %v1061 = vunpack.c.l.b16 %v838
    %v1062 = vunpack.c.h.b16 %v838
    %v1063 = vunpack.c.l.b16 %v839
    %v1064 = vunpack.c.h.b16 %v839
    %v1065 = vunpack.c.l.b16 %v840
    %v1066 = vunpack.c.h.b16 %v840
    %v1067 = vunpack.c.l.b16 %v841
    %v1068 = vunpack.c.h.b16 %v841
    %v1069 = vunpack.c.l.b16 %v842
    %v1070 = vunpack.c.h.b16 %v842
    %v1071 = vunpack.c.l.b16 %v843
    %v1072 = vunpack.c.h.b16 %v843
    %v1073 = vunpack.c.l.b16 %v844
    %v1074 = vunpack.c.h.b16 %v844
    %v1075 = vunpack.c.l.b16 %v845
    %v1076 = vunpack.c.h.b16 %v845
    %v1077 = vunpack.c.l.b16 %v846
    %v1078 = vunpack.c.h.b16 %v846
    %v1079 = vunpack.c.l.b16 %v847
    %v1080 = vunpack.c.h.b16 %v847
    %v1081 = vunpack.c.l.b16 %v848
    %v1082 = vunpack.c.h.b16 %v848
    %v1083 = vpack.c.b16 %v963, %v955
    %v1084 = vpack.c.b16 %v964, %v956
    %v1085 = vpack.c.b16 %v965, %v957
    %v1086 = vpack.c.b16 %v966, %v958
    %v1087 = vpack.c.b16 %v967, %v959
    %v1088 = vpack.c.b16 %v968, %v960
    %v1089 = vpack.c.b16 %v969, %v961
    %v1090 = vpack.c.b16 %v970, %v962
    %v1091 = vpack.c.b16 %v979, %v971
    %v1092 = vpack.c.b16 %v980, %v972
    %v1093 = vpack.c.b16 %v981, %v973
    %v1094 = vpack.c.b16 %v982, %v974
    %v1095 = vpack.c.b16 %v983, %v975
    %v1096 = vpack.c.b16 %v984, %v976
    %v1097 = vpack.c.b16 %v985, %v977
    %v1098 = vpack.c.b16 %v986, %v978
    %v1099 = vpack.c.b16 %v995, %v987
    %v1100 = vpack.c.b16 %v996, %v988
    %v1101 = vpack.c.b16 %v997, %v989
    %v1102 = vpack.c.b16 %v998, %v990
    %v1103 = vpack.c.b16 %v999, %v991
    %v1104 = vpack.c.b16 %v1000, %v992
    %v1105 = vpack.c.b16 %v1001, %v993
    %v1106 = vpack.c.b16 %v1002, %v994
    %v1107 = vpack.c.b16 %v1011, %v1003
    %v1108 = vpack.c.b16 %v1012, %v1004
    %v1109 = vpack.c.b16 %v1013, %v1005
    %v1110 = vpack.c.b16 %v1014, %v1006
    %v1111 = vpack.c.b16 %v1015, %v1007
    %v1112 = vpack.c.b16 %v1016, %v1008
    %v1113 = vpack.c.b16 %v1017, %v1009
    %v1114 = vpack.c.b16 %v1018, %v1010
    %v1115 = vpack.c.b16 %v1027, %v1019
    %v1116 = vpack.c.b16 %v1028, %v1020
    %v1117 = vpack.c.b16 %v1029, %v1021
    %v1118 = vpack.c.b16 %v1030, %v1022
    %v1119 = vpack.c.b16 %v1031, %v1023
    %v1120 = vpack.c.b16 %v1032, %v1024
    %v1121 = vpack.c.b16 %v1033, %v1025
    %v1122 = vpack.c.b16 %v1034, %v1026
    %v1123 = vpack.c.b16 %v1043, %v1035
    %v1124 = vpack.c.b16 %v1044, %v1036
    %v1125 = vpack.c.b16 %v1045, %v1037
    %v1126 = vpack.c.b16 %v1046, %v1038
    %v1127 = vpack.c.b16 %v1047, %v1039
    %v1128 = vpack.c.b16 %v1048, %v1040
    %v1129 = vpack.c.b16 %v1049, %v1041
    %v1130 = vpack.c.b16 %v1050, %v1042
    %v1131 = vpack.c.b16 %v1059, %v1051
    %v1132 = vpack.c.b16 %v1060, %v1052
    %v1133 = vpack.c.b16 %v1061, %v1053
    %v1134 = vpack.c.b16 %v1062, %v1054
    %v1135 = vpack.c.b16 %v1063, %v1055
    %v1136 = vpack.c.b16 %v1064, %v1056
    %v1137 = vpack.c.b16 %v1065, %v1057
    %v1138 = vpack.c.b16 %v1066, %v1058
    %v1139 = vpack.c.b16 %v1075, %v1067
    %v1140 = vpack.c.b16 %v1076, %v1068
    %v1141 = vpack.c.b16 %v1077, %v1069
    %v1142 = vpack.c.b16 %v1078, %v1070
    %v1143 = vpack.c.b16 %v1079, %v1071
    %v1144 = vpack.c.b16 %v1080, %v1072
    %v1145 = vpack.c.b16 %v1081, %v1073
    %v1146 = vpack.c.b16 %v1082, %v1074
    %1211 = vmatprep.subr.bf16.mxu0 %v1084
    %1212 = vmatpush1.bf16.msra.mxu0 %v1083
    %1213 = vmatprep.subr.bf16.mxu0 %v1092
    %1214 = vmatpush1.bf16.msra.mxu0 %v1091
    %1215 = vmatprep.subr.bf16.mxu0 %v1100
    %1216 = vmatpush1.bf16.msra.mxu0 %v1099
    %1217 = vmatprep.subr.bf16.mxu0 %v1108
    %1218 = vmatpush1.bf16.msra.mxu0 %v1107
    %1219 = vmatprep.subr.bf16.mxu0 %v1116
    %1220 = vmatpush1.bf16.msra.mxu0 %v1115
    %1221 = vmatprep.subr.bf16.mxu0 %v1124
    %1222 = vmatpush1.bf16.msra.mxu0 %v1123
    %1223 = vmatprep.subr.bf16.mxu0 %v1132
    %1224 = vmatpush1.bf16.msra.mxu0 %v1131
    %1225 = vmatprep.subr.bf16.mxu0 %v1140
    %1226 = vmatpush1.bf16.msra.mxu0 %v1139
    %1227 = vmatprep.subr.bf16.mxu0 0
    %1228 = vmatpush1.bf16.msra.mxu0 0
    %1229 = vmatprep.subr.bf16.mxu0 0
    %1230 = vmatpush1.bf16.msra.mxu0 0
    %1231 = vmatprep.subr.bf16.mxu0 0
    %1232 = vmatpush1.bf16.msra.mxu0 0
    %1233 = vmatprep.subr.bf16.mxu0 0
    %1234 = vmatpush1.bf16.msra.mxu0 0
    %1235 = vmatprep.subr.bf16.mxu0 0
    %1236 = vmatpush1.bf16.msra.mxu0 0
    %1237 = vmatprep.subr.bf16.mxu0 0
    %1238 = vmatpush1.bf16.msra.mxu0 0
    %1239 = vmatprep.subr.bf16.mxu0 0
    %1240 = vmatpush1.bf16.msra.mxu0 0
    %1241 = vmatprep.subr.bf16.mxu0 0
    %1242 = vmatpush1.bf16.msra.mxu0 0
    %1243 = vmatprep.mubr.bf16.mxu0 0
    %1244 = vmatmul.mubr.bf16.gmra.mrb[0].mxu0 %v775
    %v1245 = vpop.f32.mrb[0].mxu0
    %v1246 = vadd.f32 %v854, %v1245
    %v1247 = vpop.f32.mrb[0].mxu0
    %v1248 = vadd.f32 %v858, %v1247
    %v1249 = vpop.f32.mrb[0].mxu0
    %v1250 = vadd.f32 %v854, %v1249
    %v1251 = vpop.f32.mrb[0].mxu0
    %v1252 = vadd.f32 %v858, %v1251
    %1253 = vdwg.mxu0
    %1254 = vmatprep.subr.bf16.mxu0 %v1086
    %1255 = vmatpush1.bf16.msra.mxu0 %v1085
    %1256 = vmatprep.subr.bf16.mxu0 %v1094
    %1257 = vmatpush1.bf16.msra.mxu0 %v1093
    %1258 = vmatprep.subr.bf16.mxu0 %v1102
    %1259 = vmatpush1.bf16.msra.mxu0 %v1101
    %1260 = vmatprep.subr.bf16.mxu0 %v1110
    %1261 = vmatpush1.bf16.msra.mxu0 %v1109
    %1262 = vmatprep.subr.bf16.mxu0 %v1118
    %1263 = vmatpush1.bf16.msra.mxu0 %v1117
    %1264 = vmatprep.subr.bf16.mxu0 %v1126
    %1265 = vmatpush1.bf16.msra.mxu0 %v1125
    %1266 = vmatprep.subr.bf16.mxu0 %v1134
    %1267 = vmatpush1.bf16.msra.mxu0 %v1133
    %1268 = vmatprep.subr.bf16.mxu0 %v1142
    %1269 = vmatpush1.bf16.msra.mxu0 %v1141
    %1270 = vmatprep.subr.bf16.mxu0 0
    %1271 = vmatpush1.bf16.msra.mxu0 0
    %1272 = vmatprep.subr.bf16.mxu0 0
    %1273 = vmatpush1.bf16.msra.mxu0 0
    %1274 = vmatprep.subr.bf16.mxu0 0
    %1275 = vmatpush1.bf16.msra.mxu0 0
    %1276 = vmatprep.subr.bf16.mxu0 0
    %1277 = vmatpush1.bf16.msra.mxu0 0
    %1278 = vmatprep.subr.bf16.mxu0 0
    %1279 = vmatpush1.bf16.msra.mxu0 0
    %1280 = vmatprep.subr.bf16.mxu0 0
    %1281 = vmatpush1.bf16.msra.mxu0 0
    %1282 = vmatprep.subr.bf16.mxu0 0
    %1283 = vmatpush1.bf16.msra.mxu0 0
    %1284 = vmatprep.subr.bf16.mxu0 0
    %1285 = vmatpush1.bf16.msra.mxu0 0
    %1286 = vmatprep.mubr.bf16.mxu0 0
    %1287 = vmatmul.mubr.bf16.gmra.mrb[0].mxu0 %v775
    %v1288 = vpop.f32.mrb[0].mxu0
    %v1289 = vadd.f32 %v862, %v1288
    %v1290 = vpop.f32.mrb[0].mxu0
    %v1291 = vadd.f32 %v866, %v1290
    %v1292 = vpop.f32.mrb[0].mxu0
    %v1293 = vadd.f32 %v862, %v1292
    %v1294 = vpop.f32.mrb[0].mxu0
    %v1295 = vadd.f32 %v866, %v1294
    %1296 = vdwg.mxu0
    %1297 = vmatprep.subr.bf16.mxu0 %v1088
    %1298 = vmatpush1.bf16.msra.mxu0 %v1087
    %1299 = vmatprep.subr.bf16.mxu0 %v1096
    %1300 = vmatpush1.bf16.msra.mxu0 %v1095
    %1301 = vmatprep.subr.bf16.mxu0 %v1104
    %1302 = vmatpush1.bf16.msra.mxu0 %v1103
    %1303 = vmatprep.subr.bf16.mxu0 %v1112
    %1304 = vmatpush1.bf16.msra.mxu0 %v1111
    %1305 = vmatprep.subr.bf16.mxu0 %v1120
    %1306 = vmatpush1.bf16.msra.mxu0 %v1119
    %1307 = vmatprep.subr.bf16.mxu0 %v1128
    %1308 = vmatpush1.bf16.msra.mxu0 %v1127
    %1309 = vmatprep.subr.bf16.mxu0 %v1136
    %1310 = vmatpush1.bf16.msra.mxu0 %v1135
    %1311 = vmatprep.subr.bf16.mxu0 %v1144
    %1312 = vmatpush1.bf16.msra.mxu0 %v1143
    %1313 = vmatprep.subr.bf16.mxu0 0
    %1314 = vmatpush1.bf16.msra.mxu0 0
    %1315 = vmatprep.subr.bf16.mxu0 0
    %1316 = vmatpush1.bf16.msra.mxu0 0
    %1317 = vmatprep.subr.bf16.mxu0 0
    %1318 = vmatpush1.bf16.msra.mxu0 0
    %1319 = vmatprep.subr.bf16.mxu0 0
    %1320 = vmatpush1.bf16.msra.mxu0 0
    %1321 = vmatprep.subr.bf16.mxu0 0
    %1322 = vmatpush1.bf16.msra.mxu0 0
    %1323 = vmatprep.subr.bf16.mxu0 0
    %1324 = vmatpush1.bf16.msra.mxu0 0
    %1325 = vmatprep.subr.bf16.mxu0 0
    %1326 = vmatpush1.bf16.msra.mxu0 0
    %1327 = vmatprep.subr.bf16.mxu0 0
    %1328 = vmatpush1.bf16.msra.mxu0 0
    %1329 = vmatprep.mubr.bf16.mxu0 0
    %1330 = vmatmul.mubr.bf16.gmra.mrb[0].mxu0 %v775
    %v1331 = vpop.f32.mrb[0].mxu0
    %v1332 = vadd.f32 %v870, %v1331
    %v1333 = vpop.f32.mrb[0].mxu0
    %v1334 = vadd.f32 %v874, %v1333
    %v1335 = vpop.f32.mrb[0].mxu0
    %v1336 = vadd.f32 %v870, %v1335
    %v1337 = vpop.f32.mrb[0].mxu0
    %v1338 = vadd.f32 %v874, %v1337
    %1339 = vdwg.mxu0
    %1340 = vmatprep.subr.bf16.mxu0 %v1090
    %1341 = vmatpush1.bf16.msra.mxu0 %v1089
    %1342 = vmatprep.subr.bf16.mxu0 %v1098
    %1343 = vmatpush1.bf16.msra.mxu0 %v1097
    %1344 = vmatprep.subr.bf16.mxu0 %v1106
    %1345 = vmatpush1.bf16.msra.mxu0 %v1105
    %1346 = vmatprep.subr.bf16.mxu0 %v1114
    %1347 = vmatpush1.bf16.msra.mxu0 %v1113
    %1348 = vmatprep.subr.bf16.mxu0 %v1122
    %1349 = vmatpush1.bf16.msra.mxu0 %v1121
    %1350 = vmatprep.subr.bf16.mxu0 %v1130
    %1351 = vmatpush1.bf16.msra.mxu0 %v1129
    %1352 = vmatprep.subr.bf16.mxu0 %v1138
    %1353 = vmatpush1.bf16.msra.mxu0 %v1137
    %1354 = vmatprep.subr.bf16.mxu0 %v1146
    %1355 = vmatpush1.bf16.msra.mxu0 %v1145
    %1356 = vmatprep.subr.bf16.mxu0 0
    %1357 = vmatpush1.bf16.msra.mxu0 0
    %1358 = vmatprep.subr.bf16.mxu0 0
    %1359 = vmatpush1.bf16.msra.mxu0 0
    %1360 = vmatprep.subr.bf16.mxu0 0
    %1361 = vmatpush1.bf16.msra.mxu0 0
    %1362 = vmatprep.subr.bf16.mxu0 0
    %1363 = vmatpush1.bf16.msra.mxu0 0
    %1364 = vmatprep.subr.bf16.mxu0 0
    %1365 = vmatpush1.bf16.msra.mxu0 0
    %1366 = vmatprep.subr.bf16.mxu0 0
    %1367 = vmatpush1.bf16.msra.mxu0 0
    %1368 = vmatprep.subr.bf16.mxu0 0
    %1369 = vmatpush1.bf16.msra.mxu0 0
    %1370 = vmatprep.subr.bf16.mxu0 0
    %1371 = vmatpush1.bf16.msra.mxu0 0
    %1372 = vmatprep.mubr.bf16.mxu0 0
    %1373 = vmatmul.mubr.bf16.gmra.mrb[0].mxu0 %v775
    %v1374 = vpop.f32.mrb[0].mxu0
    %v1375 = vadd.f32 %v878, %v1374
    %v1376 = vpop.f32.mrb[0].mxu0
    %v1377 = vadd.f32 %v882, %v1376
    %v1378 = vpop.f32.mrb[0].mxu0
    %v1379 = vadd.f32 %v878, %v1378
    %v1380 = vpop.f32.mrb[0].mxu0
    %v1381 = vadd.f32 %v882, %v1380
    %1382 = vdwg.mxu0
    %v1383 = vpack.c.bf16 %v1250, %v1246
    %v1384 = vpack.c.bf16 %v1252, %v1248
    %v1385 = vpack.c.bf16 %v1293, %v1289
    %v1386 = vpack.c.bf16 %v1295, %v1291
    %v1387 = vpack.c.bf16 %v1336, %v1332
    %v1388 = vpack.c.bf16 %v1338, %v1334
    %v1389 = vpack.c.bf16 %v1379, %v1375
    %v1390 = vpack.c.bf16 %v1381, %v1377
    %v1399 = vunpack.c.l.b16 %v1383
    %v1400 = vunpack.c.l.b16 %v1384
    %v1401 = vunpack.c.l.b16 %v1385
    %v1402 = vunpack.c.l.b16 %v1386
    %v1403 = vunpack.c.l.b16 %v1387
    %v1404 = vunpack.c.l.b16 %v1388
    %v1405 = vunpack.c.l.b16 %v1389
    %v1406 = vunpack.c.l.b16 %v1390
    %v1407 = vunpack.c.h.b16 %v1383
    %v1408 = vunpack.c.h.b16 %v1384
    %v1409 = vunpack.c.h.b16 %v1385
    %v1410 = vunpack.c.h.b16 %v1386
    %v1411 = vunpack.c.h.b16 %v1387
    %v1412 = vunpack.c.h.b16 %v1388
    %v1413 = vunpack.c.h.b16 %v1389
    %v1414 = vunpack.c.h.b16 %v1390
    %v1415 = vpack.c.b16 %v1400, %v1399
    %v1416 = vpack.c.b16 %v1402, %v1401
    %v1417 = vpack.c.b16 %v1404, %v1403
    %v1418 = vpack.c.b16 %v1406, %v1405
    %v1419 = vpack.c.b16 %v1408, %v1407
    %v1420 = vpack.c.b16 %v1410, %v1409
    %v1421 = vpack.c.b16 %v1412, %v1411
    %v1422 = vpack.c.b16 %v1414, %v1413
    %1431 = vst [vmem:[#allocation9] sm:$0xff] %v1415
    %1432 = vst [vmem:[#allocation9 + $0x8] sm:$0xff] %v1416
    %1433 = vst [vmem:[#allocation9 + $0x10] sm:$0xff] %v1417
    %1434 = vst [vmem:[#allocation9 + $0x18] sm:$0xff] %v1418
    %1435 = vst [vmem:[#allocation9 + $0x20] sm:$0xff] %v1419
    %1436 = vst [vmem:[#allocation9 + $0x28] sm:$0xff] %v1420
    %1437 = vst [vmem:[#allocation9 + $0x30] sm:$0xff] %v1421
    %1438 = vst [vmem:[#allocation9 + $0x38] sm:$0xff] %v1422
    // Predicated region
    $region34: #{tpu_custom_call.1} parent=1 // pred_check
      _
    $region35: #{tpu_custom_call.1} parent=1 // pred_check_branch
      %1440 = sbr.rel (0) target = $region37
    $region36: #{tpu_custom_call.1} parent=1 // pred_region
      %s1442 = ssub.s32 128, 128
      %1443 = vsyncadd [#allocation4], %s1442
      %s1444 = sshll.u32 [#allocation8], 4
      %s1445 = int_to_ptr.vmem [resolvable:$true] %s1444
      %1450 = dma.vmem_to_hbm [thread:$0]  %s1445, 128, %s5, [#allocation4], 64, 64, 4
    $region37: #{tpu_custom_call.1} parent=1 // pred_fallthru
      _
    // Predicated region
    $region38: #{tpu_custom_call.1} parent=1 // pred_check
      _
    $region39: #{tpu_custom_call.1} parent=1 // pred_check_branch
      %1452 = sbr.rel (0) target = $region41
    $region40: #{tpu_custom_call.1} parent=1 // pred_region
      %s1454 = ssub.s32 1024, 1024
      %1455 = vsyncadd [#allocation10], %s1454
      %s1456 = sshll.u32 [#allocation9], 4
      %s1457 = int_to_ptr.vmem [resolvable:$true] %s1456
      %1462 = dma.vmem_to_hbm [thread:$0]  %s1457, 1024, %s6, [#allocation10], 512, 512, 32
    $region41: #{tpu_custom_call.1} parent=1 // pred_fallthru
      _
    // Predicated region
    $region42: #{tpu_custom_call.1} parent=1 // pred_check
      _
    $region43: #{tpu_custom_call.1} parent=1 // pred_check_branch
      %1464 = sbr.rel (0) target = $region45
    $region44: #{tpu_custom_call.1} parent=1 // pred_region
      %1465 = dma.done [#allocation4], 128
    $region45: #{tpu_custom_call.1} parent=1 // pred_fallthru
      _
    // Predicated region
    $region46: #{tpu_custom_call.1} parent=1 // pred_check
      _
    $region47: #{tpu_custom_call.1} parent=1 // pred_check_branch
      %1467 = sbr.rel (0) target = $region49
    $region48: #{tpu_custom_call.1} parent=1 // pred_region
      %1468 = dma.done [#allocation10], 1024
    $region49: #{tpu_custom_call.1} parent=1 // pred_fallthru
      _
    %1469 = vsyncpa [#allocation3], 1
    %1470 = vsyncpa [#allocation6], 1
    %1471 = vsyncpa [#allocation4], 1
    %1472 = vsyncpa [#allocation10], 1

</llo_original>
